<compile_context>
chip_gen: v7x
topology: tpu7x:2x2x1
jax: 0.10.0
libtpu: 0.0.40
codegen_flags: <defaults>
</compile_context>

<pallas_src>
import functools

import jax
import jax.numpy as jnp
import numpy as np
from jax.experimental import pallas as pl
from jax.experimental.pallas import tpu as pltpu


def _round_up(x, m):
    return ((x + m - 1) // m) * m


def _pick_tile_h(ho):
    """Largest row tile <= min(Ho//2, 32) that divides Ho (>=2 grid steps per batch
    so the pipeline can overlap); fall back to the full height for tiny images."""
    for t in range(min(ho // 2, 32), 3, -1):
        if ho % t == 0:
            return t
    return ho


def _conv_bias_relu_kernel(x_ref, w_ref, b_ref, o_ref, *, th, wp_pad, wo, kh, kw, cout_p):
    """One (batch, row-tile) per grid step.

    x_ref: (1, FLAT, Cin)        bf16 zero-padded image, H/W flattened row-major
                                 with row stride wp_pad (full image of this batch).
    w_ref: (KH*KW, Cin, Cout_p)  bf16 conv taps (grid-invariant).
    b_ref: (1, Cout_p)           f32 bias.
    o_ref: (1, TH, Wo, Cout_p)   f32 output tile (lane-dense: Cout_p % 128 == 0).
    """
    r = pl.program_id(1)
    m = th * wp_pad                    # matmul M (includes KW-1 garbage cols per row)
    slab_rows = (th + kh) * wp_pad     # rows covering every tap window (+ margin row)

    # Single aligned fetch of the rows this tile needs.  th*wp_pad is a multiple of
    # 16, so the dynamic start is always sublane-aligned even for packed bf16.
    start = pl.multiple_of(r * m, 16)
    slab = x_ref[0, pl.ds(start, slab_rows), :]          # (slab_rows, Cin) bf16

    # Direct convolution: tap (i, j) is a contiguous sublane window of the slab
    # (offset i*wp_pad + j) matmul'd on the MXU; all taps accumulate into a single
    # lane-dense f32 accumulator.
    acc = jnp.zeros((m, cout_p), dtype=jnp.float32)
    for t in range(kh * kw):
        i, j = divmod(t, kw)
        off = i * wp_pad + j
        win = slab[off:off + m, :]                       # (m, Cin), contiguous window
        acc = acc + jnp.dot(win, w_ref[t], preferred_element_type=jnp.float32)

    acc = acc + b_ref[...]                               # bias broadcast (f32)
    acc = jnp.maximum(acc, 0.0)                          # ReLU (f32)

    # Drop the garbage columns once (aligned slice), then one full-width store.
    y = acc.reshape(th, wp_pad, cout_p)[:, :wo, :]
    o_ref[...] = y[None, ...].astype(o_ref.dtype)


def conv_module_forward(x_nchw, weight, bias, *, padding=1):
    """ConvModule default forward: ReLU(Conv2d(x, W, b, stride=1, pad=p, dil=1))."""
    n, cin, h, w = x_nchw.shape
    cout, cin_w, kh, kw = weight.shape
    assert cin == cin_w

    hp = h + 2 * padding
    wp = w + 2 * padding
    ho = hp - kh + 1                       # stride=1, dilation=1
    wo = wp - kw + 1

    cout_p = _round_up(cout, 128)          # lane-dense accumulator / output stores
    th = _pick_tile_h(ho)
    n_h_tiles = ho // th

    # Row stride of the flattened image: multiple of 8, and th*wp_pad a multiple of
    # 16 so every per-tile slab fetch is sublane-aligned for bf16.
    wp_pad = _round_up(wp, 8)
    if (th * wp_pad) % 16:
        wp_pad = _round_up(wp, 16)

    flat = (hp + 1) * wp_pad               # +1 zero margin row for the last tap windows

    # Glue: NCHW -> NHWC, zero pad (conv padding + alignment margin), flatten H/W,
    # cast to bf16.  (Keeping NHWC across adjacent layers would remove two of these
    # HBM passes; outside the scope of a single-module kernel.)
    x_nhwc = jnp.transpose(x_nchw, (0, 2, 3, 1))
    x_pad = jnp.pad(
        x_nhwc,
        ((0, 0),
         (padding, padding + 1),
         (padding, wp_pad - w - padding),
         (0, 0)))
    x_flat = x_pad.reshape(n, flat, cin).astype(jnp.bfloat16)

    # Weight -> (KH*KW, Cin, Cout_p) bf16 taps; bias -> (1, Cout_p) f32.
    w_taps = jnp.transpose(weight, (2, 3, 1, 0)).reshape(kh * kw, cin, cout)
    w_taps = jnp.pad(w_taps, ((0, 0), (0, 0), (0, cout_p - cout))).astype(jnp.bfloat16)
    b_pad = jnp.pad(bias, (0, cout_p - cout)).astype(jnp.float32).reshape(1, cout_p)

    kernel = functools.partial(
        _conv_bias_relu_kernel,
        th=th, wp_pad=wp_pad, wo=wo, kh=kh, kw=kw, cout_p=cout_p)

    out = pl.pallas_call(
        kernel,
        out_shape=jax.ShapeDtypeStruct((n, ho, wo, cout_p), jnp.float32),
        grid_spec=pltpu.PrefetchScalarGridSpec(
            num_scalar_prefetch=0,
            grid=(n, n_h_tiles),
            in_specs=[
                # Flattened image of this batch: block index ignores the row-tile
                # index, so it is DMA'd once per batch and stays resident across
                # the row tiles.
                pl.BlockSpec((1, flat, cin), lambda b, r: (b, 0, 0)),
                # Grid-invariant weight / bias (fetched once).  On v7x these could
                # additionally use pipeline_mode=pl.Buffered(1) to save VMEM.
                pl.BlockSpec((kh * kw, cin, cout_p), lambda b, r: (0, 0, 0)),
                pl.BlockSpec((1, cout_p), lambda b, r: (0, 0)),
            ],
            out_specs=pl.BlockSpec((1, th, wo, cout_p), lambda b, r: (b, r, 0, 0)),
        ),
        compiler_params=pltpu.CompilerParams(
            dimension_semantics=("parallel", "parallel"),
            # Conservative explicit budget (safe on v5e/v6e/v7x); the per-step
            # working set here is far below it.
            vmem_limit_bytes=32 * 1024 * 1024,
        ),
    )(x_flat, w_taps, b_pad)

    # Back to the PyTorch contract: drop channel padding, NHWC -> NCHW.
    return jnp.transpose(out[..., :cout], (0, 3, 1, 2))


if __name__ == "__main__":
    key = jax.random.PRNGKey(0)
    k_x, k_w, k_b = jax.random.split(key, 3)

    N, Cin, H, W = 2, 4, 16, 16
    Cout, KH, KW = 8, 3, 3
    padding = 1

    x = jax.random.normal(k_x, (N, Cin, H, W), dtype=jnp.float32)
    fan_in = Cin * KH * KW
    weight = jax.random.normal(k_w, (Cout, Cin, KH, KW), dtype=jnp.float32) * jnp.sqrt(
        2.0 / fan_in)
    bias = jax.random.normal(k_b, (Cout,), dtype=jnp.float32) * 0.01

    out = jax.block_until_ready(conv_module_forward(x, weight, bias, padding=padding))

    # Reference on the same bf16-quantized operands (the bf16 cast is a deliberate
    # kernel design choice); accumulation is f32 in both paths.
    xq = x.astype(jnp.bfloat16).astype(jnp.float32)
    wq = weight.astype(jnp.bfloat16).astype(jnp.float32)
    ref = jax.lax.conv_general_dilated(
        xq, wq,
        window_strides=(1, 1),
        padding=[(padding, padding), (padding, padding)],
        dimension_numbers=("NCHW", "OIHW", "NCHW"),
        precision=jax.lax.Precision.HIGHEST)
    ref = jnp.maximum(ref + bias[None, :, None, None], 0.0)

    np.testing.assert_allclose(np.asarray(out), np.asarray(ref), rtol=1e-4, atol=1e-4)
    print("KERNEL_OK")
</pallas_src>

<mosaic_0001>
module attributes {stable_mosaic.version = 11 : i64} {
  func.func @_conv_bias_relu_kernel(%arg0: i32, %arg1: i32, %arg2: memref<1x456x4xbf16, #tpu.memory_space<vmem>>, %arg3: memref<9x4x128xbf16, #tpu.memory_space<vmem>>, %arg4: memref<1x128xf32, #tpu.memory_space<vmem>>, %arg5: memref<1x8x16x128xf32, #tpu.memory_space<vmem>>) attributes {dimension_semantics = [#tpu.dimension_semantics<parallel>, #tpu.dimension_semantics<parallel>], iteration_bounds = array<i64: 2, 2>, scalar_prefetch = 0 : i64, scratch_operands = 0 : i64, tpu.core_type = #tpu.core_type<tc>, window_params = [{transform_indices = @transform_0, window_bounds = array<i64: 1, 456, 4>}, {pipeline_mode = #tpu.pipeline_mode<synchronous>, transform_indices = @transform_1, window_bounds = array<i64: 9, 4, 128>}, {pipeline_mode = #tpu.pipeline_mode<synchronous>, transform_indices = @transform_2, window_bounds = array<i64: 1, 128>}, {transform_indices = @transform_3, window_bounds = array<i64: 1, 8, 16, 128>}]} {
    %c192_i32 = arith.constant 192 : i32
    %0 = arith.muli %arg1, %c192_i32 : i32
    %1 = tpu.assume_multiple %0, 16 : i32
    %c0 = arith.constant 0 : index
    %2 = arith.index_cast %1 : i32 to index
    %c0_0 = arith.constant 0 : index
    %3 = vector.load %arg2[%c0, %2, %c0_0] : memref<1x456x4xbf16, #tpu.memory_space<vmem>>, vector<1x264x4xbf16>
    %4 = vector.shape_cast %3 : vector<1x264x4xbf16> to vector<264x4xbf16>
    %cst = arith.constant 0.000000e+00 : f32
    %5 = vector.broadcast %cst : f32 to vector<192x128xf32>
    %6 = vector.extract_strided_slice %4 {offsets = [0, 0], sizes = [192, 4], strides = [1, 1]} : vector<264x4xbf16> to vector<192x4xbf16>
    %c0_1 = arith.constant 0 : index
    %c0_2 = arith.constant 0 : index
    %c0_3 = arith.constant 0 : index
    %7 = vector.load %arg3[%c0_1, %c0_2, %c0_3] : memref<9x4x128xbf16, #tpu.memory_space<vmem>>, vector<1x4x128xbf16>
    %8 = vector.shape_cast %7 : vector<1x4x128xbf16> to vector<4x128xbf16>
    %cst_4 = arith.constant dense<0.000000e+00> : vector<192x128xf32>
    %9 = tpu.matmul %6, %8, %cst_4 {dimension_numbers = #tpu.dot_dimension_numbers<[1], [0], [0], [1], [0, 0, 1, 1], [], []>} : vector<192x4xbf16>, vector<4x128xbf16>, vector<192x128xf32> -> vector<192x128xf32>
    %10 = arith.addf %5, %9 : vector<192x128xf32>
    %11 = vector.extract_strided_slice %4 {offsets = [1, 0], sizes = [192, 4], strides = [1, 1]} : vector<264x4xbf16> to vector<192x4xbf16>
    %c1 = arith.constant 1 : index
    %c0_5 = arith.constant 0 : index
    %c0_6 = arith.constant 0 : index
    %12 = vector.load %arg3[%c1, %c0_5, %c0_6] : memref<9x4x128xbf16, #tpu.memory_space<vmem>>, vector<1x4x128xbf16>
    %13 = vector.shape_cast %12 : vector<1x4x128xbf16> to vector<4x128xbf16>
    %cst_7 = arith.constant dense<0.000000e+00> : vector<192x128xf32>
    %14 = tpu.matmul %11, %13, %cst_7 {dimension_numbers = #tpu.dot_dimension_numbers<[1], [0], [0], [1], [0, 0, 1, 1], [], []>} : vector<192x4xbf16>, vector<4x128xbf16>, vector<192x128xf32> -> vector<192x128xf32>
    %15 = arith.addf %10, %14 : vector<192x128xf32>
    %16 = vector.extract_strided_slice %4 {offsets = [2, 0], sizes = [192, 4], strides = [1, 1]} : vector<264x4xbf16> to vector<192x4xbf16>
    %c2 = arith.constant 2 : index
    %c0_8 = arith.constant 0 : index
    %c0_9 = arith.constant 0 : index
    %17 = vector.load %arg3[%c2, %c0_8, %c0_9] : memref<9x4x128xbf16, #tpu.memory_space<vmem>>, vector<1x4x128xbf16>
    %18 = vector.shape_cast %17 : vector<1x4x128xbf16> to vector<4x128xbf16>
    %cst_10 = arith.constant dense<0.000000e+00> : vector<192x128xf32>
    %19 = tpu.matmul %16, %18, %cst_10 {dimension_numbers = #tpu.dot_dimension_numbers<[1], [0], [0], [1], [0, 0, 1, 1], [], []>} : vector<192x4xbf16>, vector<4x128xbf16>, vector<192x128xf32> -> vector<192x128xf32>
    %20 = arith.addf %15, %19 : vector<192x128xf32>
    %21 = vector.extract_strided_slice %4 {offsets = [24, 0], sizes = [192, 4], strides = [1, 1]} : vector<264x4xbf16> to vector<192x4xbf16>
    %c3 = arith.constant 3 : index
    %c0_11 = arith.constant 0 : index
    %c0_12 = arith.constant 0 : index
    %22 = vector.load %arg3[%c3, %c0_11, %c0_12] : memref<9x4x128xbf16, #tpu.memory_space<vmem>>, vector<1x4x128xbf16>
    %23 = vector.shape_cast %22 : vector<1x4x128xbf16> to vector<4x128xbf16>
    %cst_13 = arith.constant dense<0.000000e+00> : vector<192x128xf32>
    %24 = tpu.matmul %21, %23, %cst_13 {dimension_numbers = #tpu.dot_dimension_numbers<[1], [0], [0], [1], [0, 0, 1, 1], [], []>} : vector<192x4xbf16>, vector<4x128xbf16>, vector<192x128xf32> -> vector<192x128xf32>
    %25 = arith.addf %20, %24 : vector<192x128xf32>
    %26 = vector.extract_strided_slice %4 {offsets = [25, 0], sizes = [192, 4], strides = [1, 1]} : vector<264x4xbf16> to vector<192x4xbf16>
    %c4 = arith.constant 4 : index
    %c0_14 = arith.constant 0 : index
    %c0_15 = arith.constant 0 : index
    %27 = vector.load %arg3[%c4, %c0_14, %c0_15] : memref<9x4x128xbf16, #tpu.memory_space<vmem>>, vector<1x4x128xbf16>
    %28 = vector.shape_cast %27 : vector<1x4x128xbf16> to vector<4x128xbf16>
    %cst_16 = arith.constant dense<0.000000e+00> : vector<192x128xf32>
    %29 = tpu.matmul %26, %28, %cst_16 {dimension_numbers = #tpu.dot_dimension_numbers<[1], [0], [0], [1], [0, 0, 1, 1], [], []>} : vector<192x4xbf16>, vector<4x128xbf16>, vector<192x128xf32> -> vector<192x128xf32>
    %30 = arith.addf %25, %29 : vector<192x128xf32>
    %31 = vector.extract_strided_slice %4 {offsets = [26, 0], sizes = [192, 4], strides = [1, 1]} : vector<264x4xbf16> to vector<192x4xbf16>
    %c5 = arith.constant 5 : index
    %c0_17 = arith.constant 0 : index
    %c0_18 = arith.constant 0 : index
    %32 = vector.load %arg3[%c5, %c0_17, %c0_18] : memref<9x4x128xbf16, #tpu.memory_space<vmem>>, vector<1x4x128xbf16>
    %33 = vector.shape_cast %32 : vector<1x4x128xbf16> to vector<4x128xbf16>
    %cst_19 = arith.constant dense<0.000000e+00> : vector<192x128xf32>
    %34 = tpu.matmul %31, %33, %cst_19 {dimension_numbers = #tpu.dot_dimension_numbers<[1], [0], [0], [1], [0, 0, 1, 1], [], []>} : vector<192x4xbf16>, vector<4x128xbf16>, vector<192x128xf32> -> vector<192x128xf32>
    %35 = arith.addf %30, %34 : vector<192x128xf32>
    %36 = vector.extract_strided_slice %4 {offsets = [48, 0], sizes = [192, 4], strides = [1, 1]} : vector<264x4xbf16> to vector<192x4xbf16>
    %c6 = arith.constant 6 : index
    %c0_20 = arith.constant 0 : index
    %c0_21 = arith.constant 0 : index
    %37 = vector.load %arg3[%c6, %c0_20, %c0_21] : memref<9x4x128xbf16, #tpu.memory_space<vmem>>, vector<1x4x128xbf16>
    %38 = vector.shape_cast %37 : vector<1x4x128xbf16> to vector<4x128xbf16>
    %cst_22 = arith.constant dense<0.000000e+00> : vector<192x128xf32>
    %39 = tpu.matmul %36, %38, %cst_22 {dimension_numbers = #tpu.dot_dimension_numbers<[1], [0], [0], [1], [0, 0, 1, 1], [], []>} : vector<192x4xbf16>, vector<4x128xbf16>, vector<192x128xf32> -> vector<192x128xf32>
    %40 = arith.addf %35, %39 : vector<192x128xf32>
    %41 = vector.extract_strided_slice %4 {offsets = [49, 0], sizes = [192, 4], strides = [1, 1]} : vector<264x4xbf16> to vector<192x4xbf16>
    %c7 = arith.constant 7 : index
    %c0_23 = arith.constant 0 : index
    %c0_24 = arith.constant 0 : index
    %42 = vector.load %arg3[%c7, %c0_23, %c0_24] : memref<9x4x128xbf16, #tpu.memory_space<vmem>>, vector<1x4x128xbf16>
    %43 = vector.shape_cast %42 : vector<1x4x128xbf16> to vector<4x128xbf16>
    %cst_25 = arith.constant dense<0.000000e+00> : vector<192x128xf32>
    %44 = tpu.matmul %41, %43, %cst_25 {dimension_numbers = #tpu.dot_dimension_numbers<[1], [0], [0], [1], [0, 0, 1, 1], [], []>} : vector<192x4xbf16>, vector<4x128xbf16>, vector<192x128xf32> -> vector<192x128xf32>
    %45 = arith.addf %40, %44 : vector<192x128xf32>
    %46 = vector.extract_strided_slice %4 {offsets = [50, 0], sizes = [192, 4], strides = [1, 1]} : vector<264x4xbf16> to vector<192x4xbf16>
    %c8 = arith.constant 8 : index
    %c0_26 = arith.constant 0 : index
    %c0_27 = arith.constant 0 : index
    %47 = vector.load %arg3[%c8, %c0_26, %c0_27] : memref<9x4x128xbf16, #tpu.memory_space<vmem>>, vector<1x4x128xbf16>
    %48 = vector.shape_cast %47 : vector<1x4x128xbf16> to vector<4x128xbf16>
    %cst_28 = arith.constant dense<0.000000e+00> : vector<192x128xf32>
    %49 = tpu.matmul %46, %48, %cst_28 {dimension_numbers = #tpu.dot_dimension_numbers<[1], [0], [0], [1], [0, 0, 1, 1], [], []>} : vector<192x4xbf16>, vector<4x128xbf16>, vector<192x128xf32> -> vector<192x128xf32>
    %50 = arith.addf %45, %49 : vector<192x128xf32>
    %c0_29 = arith.constant 0 : index
    %c0_30 = arith.constant 0 : index
    %51 = vector.load %arg4[%c0_29, %c0_30] : memref<1x128xf32, #tpu.memory_space<vmem>>, vector<1x128xf32>
    %52 = vector.broadcast %51 : vector<1x128xf32> to vector<192x128xf32>
    %53 = arith.addf %50, %52 : vector<192x128xf32>
    %cst_31 = arith.constant 0.000000e+00 : f32
    %54 = vector.broadcast %cst_31 : f32 to vector<192x128xf32>
    %55 = arith.maximumf %53, %54 : vector<192x128xf32>
    %56 = vector.shape_cast %55 : vector<192x128xf32> to vector<8x24x128xf32>
    %57 = vector.extract_strided_slice %56 {offsets = [0, 0, 0], sizes = [8, 16, 128], strides = [1, 1, 1]} : vector<8x24x128xf32> to vector<8x16x128xf32>
    %58 = vector.shape_cast %57 : vector<8x16x128xf32> to vector<1x8x16x128xf32>
    %c0_32 = arith.constant 0 : index
    %c0_33 = arith.constant 0 : index
    %c0_34 = arith.constant 0 : index
    %c0_35 = arith.constant 0 : index
    %59 = vector.load %arg5[%c0_32, %c0_33, %c0_34, %c0_35] : memref<1x8x16x128xf32, #tpu.memory_space<vmem>>, vector<1x8x16x128xf32>
    tpu.vector_store %arg5[%c0_32, %c0_33, %c0_34, %c0_35], %58 {strides = array<i32>} : memref<1x8x16x128xf32, #tpu.memory_space<vmem>>, vector<1x8x16x128xf32>,
    return
  }
  func.func @transform_0(%arg0: i32, %arg1: i32) -> (i32, i32, i32) {
    %c0_i32 = arith.constant 0 : i32
    %c0_i32_0 = arith.constant 0 : i32
    %c0_i32_1 = arith.constant 0 : i32
    return %arg0, %c0_i32, %c0_i32_0 : i32, i32, i32
  }
  func.func @transform_1(%arg0: i32, %arg1: i32) -> (i32, i32, i32) {
    %c0_i32 = arith.constant 0 : i32
    %c0_i32_0 = arith.constant 0 : i32
    %c0_i32_1 = arith.constant 0 : i32
    %c0_i32_2 = arith.constant 0 : i32
    return %c0_i32, %c0_i32_0, %c0_i32_1 : i32, i32, i32
  }
  func.func @transform_2(%arg0: i32, %arg1: i32) -> (i32, i32) {
    %c0_i32 = arith.constant 0 : i32
    %c0_i32_0 = arith.constant 0 : i32
    %c0_i32_1 = arith.constant 0 : i32
    return %c0_i32, %c0_i32_0 : i32, i32
  }
  func.func @transform_3(%arg0: i32, %arg1: i32) -> (i32, i32, i32, i32) {
    %c0_i32 = arith.constant 0 : i32
    %c0_i32_0 = arith.constant 0 : i32
    %c0_i32_1 = arith.constant 0 : i32
    return %arg0, %arg1, %c0_i32, %c0_i32_0 : i32, i32, i32, i32
  }
}

</mosaic_0001>

<llo_original>
// kernel: tpu_custom_call.1
$region0: #{tpu_custom_call.1}
  #allocation0 [shape = 'u32[]', space=smem, size = 0x4, offset = 0x4, fixed_abs, tag = 'smem constant byte address 0x4 - core index']
  #allocation1 [shape = 'u32[144,128]{1,0:T(1,128)}', space=vmem, size = 0x12000, scoped, tag = 'internal scratch']
  %s0 = inlined_call_operand.vmem [shape: bf16[2,456,4], index: 0, kind: input, shape index: {}]
  %s1 = inlined_call_operand.vmem [shape: bf16[9,4,128], index: 1, kind: input, shape index: {}]
  %s2 = inlined_call_operand.vmem [shape: f32[1,128], index: 2, kind: input, shape index: {}]
  %s3 = inlined_call_operand.hbm [shape: f32[2,16,16,128], index: 3, kind: output, shape index: {}]
  %s4 = sld [smem:[#allocation0]]
  $region45: #{tpu_custom_call.1} parent=0
    _
  %s6 = ssub.s32 1, %s4
  %s7 = scalar_select 0, %s6, %s4
  $region1: #{tpu_custom_call.1} parent=0
    #allocation2 [shape = 'u8[131072]{0}', space=vmem, size = 0x20000, scoped, tag = 'output window, operand 0']
    #allocation3 [shape = 's32[2]{0}', space=sflag, size = 0x8, scoped, tag = 'scoped memory for tpu_custom_call.1']
    %8 = vsyncpa [#allocation3], 0
    %s9 = scalar_lea.sflag [#allocation3], 1
    %10 = vsyncpa %s9, 0
    loop: start=0, step=1, limit=6
    $region2: #{tpu_custom_call.1} parent=1 // loop_pre_header
      _
    $region3: #{tpu_custom_call.1} parent=1 // loop_header
      %s12 = sphi 0, %s16
      %p13 = scmp.ge.s32.totalorder %s12, 6
      %s19 = sphi 0, %s31
      %s20 = sphi 0, %s27
      %s21 = sphi 0, %s19
      %s22 = sphi 0, %s20
      %s23 = sphi 0, %s21
      %s24 = sphi 0, %s22
      %s34 = sphi 0, %s36
      %s37 = sphi 0, %s34
      %s38 = sphi 0, %s37
      %s54 = sphi 0, %s38
      %s58 = sphi 0, %s58
      %s60 = sphi 0, %s58
      %s61 = sphi 0, %s60
      %s75 = sphi 0, %s61
      %s79 = sphi 0, %s79
      %s81 = sphi 0, %s79
      %s82 = sphi 0, %s81
      %s96 = sphi 0, %s82
      %s104 = sphi 0, %s106
      %s107 = sphi 0, %s104
      %s108 = sphi 0, %s107
      %s124 = sphi 0, %s108
    $region4: #{tpu_custom_call.1} parent=1 // loop_header_branch
      %15 = sbr.rel (%p13) target = $region8
    $region5: #{tpu_custom_call.1} parent=1 // loop_body
      %s17 = ssub.s32 %s12, 1
      %s18 = ssub.s32 %s12, 2
      %s25 = sadd.s32 1, %s20
      %p26 = scmp.ge.s32.totalorder %s25, 2
      %s27 = scalar_select %p26, 0, %s25
      %s28 = sadd.s32 1, %s19
      %s29 = scalar_select %p26, %s28, %s19
      %p30 = scmp.ge.s32.totalorder %s29, 2
      %s31 = scalar_select %p30, 0, %s29
      %s32 = ssub.s32 %s19, %s31
      %p33 = scmp.eq.s32.totalorder %s32, 0
      %s35 = sadd.s32 %s34, 1
      %s36 = scalar_select %p33, %s34, %s35
      %p39 = pneg %p33
      %p40 = scmp.eq.s32.totalorder %s12, 3
      %p41 = por %p39, %p40
      %p42 = scmp.ne.s32.totalorder %s34, %s37
      %p43 = scmp.eq.s32.totalorder %s12, 0
      %p44 = por %p42, %p43
      %p45 = scmp.ne.s32.totalorder %s34, %s37
      %p46 = scmp.eq.s32.totalorder %s17, 3
      %p47 = por %p45, %p46
      %p48 = scmp.ne.s32.totalorder %s37, %s38
      %p49 = scmp.eq.s32.totalorder %s17, 0
      %p50 = por %p48, %p49
      %p51 = scmp.ne.s32.totalorder %s37, %s38
      %p52 = scmp.eq.s32.totalorder %s18, 3
      %p53 = por %p51, %p52
      %p55 = scmp.ne.s32.totalorder %s38, %s54
      %p56 = scmp.eq.s32.totalorder %s18, 0
      %p57 = por %p55, %p56
      %s59 = sadd.s32 %s58, 1
      %p62 = scmp.eq.s32.totalorder %s12, 3
      %p63 = scmp.ne.s32.totalorder %s58, %s60
      %p64 = scmp.eq.s32.totalorder %s12, 0
      %p65 = por %p63, %p64
      %p66 = scmp.ne.s32.totalorder %s58, %s60
      %p67 = scmp.eq.s32.totalorder %s17, 3
      %p68 = por %p66, %p67
      %p69 = scmp.ne.s32.totalorder %s60, %s61
      %p70 = scmp.eq.s32.totalorder %s17, 0
      %p71 = por %p69, %p70
      %p72 = scmp.ne.s32.totalorder %s60, %s61
      %p73 = scmp.eq.s32.totalorder %s18, 3
      %p74 = por %p72, %p73
      %p76 = scmp.ne.s32.totalorder %s61, %s75
      %p77 = scmp.eq.s32.totalorder %s18, 0
      %p78 = por %p76, %p77
      %s80 = sadd.s32 %s79, 1
      %p83 = scmp.eq.s32.totalorder %s12, 3
      %p84 = scmp.ne.s32.totalorder %s79, %s81
      %p85 = scmp.eq.s32.totalorder %s12, 0
      %p86 = por %p84, %p85
      %p87 = scmp.ne.s32.totalorder %s79, %s81
      %p88 = scmp.eq.s32.totalorder %s17, 3
      %p89 = por %p87, %p88
      %p90 = scmp.ne.s32.totalorder %s81, %s82
      %p91 = scmp.eq.s32.totalorder %s17, 0
      %p92 = por %p90, %p91
      %p93 = scmp.ne.s32.totalorder %s81, %s82
      %p94 = scmp.eq.s32.totalorder %s18, 3
      %p95 = por %p93, %p94
      %p97 = scmp.ne.s32.totalorder %s82, %s96
      %p98 = scmp.eq.s32.totalorder %s18, 0
      %p99 = por %p97, %p98
      %s100 = ssub.s32 %s19, %s31
      %s101 = ssub.s32 %s20, %s27
      %s102 = sor.u32 %s100, %s101
      %p103 = scmp.eq.s32.totalorder %s102, 0
      %s105 = sadd.s32 %s104, 1
      %s106 = scalar_select %p103, %s104, %s105
      %p109 = pneg %p103
      %p110 = scmp.eq.s32.totalorder %s12, 3
      %p111 = por %p109, %p110
      %p112 = scmp.ne.s32.totalorder %s104, %s107
      %p113 = scmp.eq.s32.totalorder %s12, 0
      %p114 = por %p112, %p113
      %p115 = scmp.ne.s32.totalorder %s104, %s107
      %p116 = scmp.eq.s32.totalorder %s17, 3
      %p117 = por %p115, %p116
      %p118 = scmp.ne.s32.totalorder %s107, %s108
      %p119 = scmp.eq.s32.totalorder %s17, 0
      %p120 = por %p118, %p119
      %p121 = scmp.ne.s32.totalorder %s107, %s108
      %p122 = scmp.eq.s32.totalorder %s18, 3
      %p123 = por %p121, %p122
      %p125 = scmp.ne.s32.totalorder %s108, %s124
      %p126 = scmp.eq.s32.totalorder %s18, 0
      %p127 = por %p125, %p126
      %p128 = scmp.le.s32.totalorder 1, %s12
      %p129 = scmp.lt.s32.totalorder %s12, 5
      %p130 = pnand %p128, %p129
      %p131 = pneg %p130
      // Predicated region
      $region9: #{tpu_custom_call.1} parent=5 // pred_check
        _
      $region10: #{tpu_custom_call.1} parent=5 // pred_check_branch
        %133 = sbr.rel (%p130) target = $region12
      $region11: #{tpu_custom_call.1} parent=5 // pred_region
        %s134 = ssub.s32 %s12, 1
        // Predicated region
        $region13: #{tpu_custom_call.1} parent=11 // pred_check
          %p135 = pneg %p71
        $region14: #{tpu_custom_call.1} parent=11 // pred_check_branch
          %137 = sbr.rel (%p135) target = $region16
        $region15: #{tpu_custom_call.1} parent=11 // pred_region
          _
        $region16: #{tpu_custom_call.1} parent=11 // pred_fallthru
          _
        // Predicated region
        $region17: #{tpu_custom_call.1} parent=11 // pred_check
          %p138 = pneg %p92
        $region18: #{tpu_custom_call.1} parent=11 // pred_check_branch
          %140 = sbr.rel (%p138) target = $region20
        $region19: #{tpu_custom_call.1} parent=11 // pred_region
          _
        $region20: #{tpu_custom_call.1} parent=11 // pred_fallthru
          _
      $region12: #{tpu_custom_call.1} parent=5 // pred_fallthru
        _
      %p141 = scmp.lt.s32.totalorder %s12, 4
      // Predicated region
      $region21: #{tpu_custom_call.1} parent=5 // pred_check
        %p142 = pneg %p141
      $region22: #{tpu_custom_call.1} parent=5 // pred_check_branch
        %144 = sbr.rel (%p142) target = $region24
      $region23: #{tpu_custom_call.1} parent=5 // pred_region
        // Predicated region
        $region25: #{tpu_custom_call.1} parent=23 // pred_check
          %p145 = pneg %p44
        $region26: #{tpu_custom_call.1} parent=23 // pred_check_branch
          %147 = sbr.rel (%p145) target = $region28
        $region27: #{tpu_custom_call.1} parent=23 // pred_region
          %p148 = scmp.lt.s32.totalorder %s19, 1
          %s149 = scalar_select %p148, %s19, 1
          %s150 = smul.addr %s149, 57
          %s151 = smul.addr %s150, 4
          %s152 = scalar_lea.vmem %s0, %s151
        $region28: #{tpu_custom_call.1} parent=23 // pred_fallthru
          _
      $region24: #{tpu_custom_call.1} parent=5 // pred_fallthru
        _
      %p153 = scmp.le.s32.totalorder 1, %s12
      %p154 = scmp.lt.s32.totalorder %s12, 5
      %p155 = pnand %p153, %p154
      %p156 = pneg %p155
      // Predicated region
      $region29: #{tpu_custom_call.1} parent=5 // pred_check
        _
      $region30: #{tpu_custom_call.1} parent=5 // pred_check_branch
        %158 = sbr.rel (%p155) target = $region32
      $region31: #{tpu_custom_call.1} parent=5 // pred_region
        %s159 = ssub.s32 %s12, 1
        %p160 = scmp.lt.s32.totalorder %s21, 1
        %s161 = scalar_select %p160, %s21, 1
        %s162 = smul.addr %s161, 57
        %s163 = smul.addr %s162, 4
        %s164 = scalar_lea.vmem %s0, %s163
        %p165 = pneg %p50
        %p166 = pneg %p47
        %p167 = pneg %p71
        %p168 = pneg %p68
        %p169 = pneg %p92
        %p170 = pneg %p89
        %p171 = pneg %p120
        %p172 = pneg %p117
        %s173 = sand.u32 %s107, 1
        %s174 = scalar_lea.sflag [#allocation3], %s173
        %s175 = sand.u32 %s107, 1
        %s176 = smul.addr %s175, 128
        %s177 = scalar_lea.vmem [#allocation2], %s176
        %p178 = scmp.lt.s32.totalorder %s21, 1
        %s179 = scalar_select %p178, %s21, 1
        %s180 = smul.addr %s179, 57
        %s181 = smul.addr %s180, 4
        %s182 = scalar_lea.vmem %s0, %s181
        %s183 = smul.u32 8, %s22
        %s185 = smul.u32 %s22, 192
        %s186 = sshra.s32 %s185, 3
        %s187 = sand.u32 %s185, 7
        %s188 = smul.addr %s186, 4
        %s189 = scalar_lea.vmem %s182, %s188
        %v190 = vld [vmem:[%s189] sm:$0xf]
        %v191 = vld [vmem:[%s189 + $0x4] sm:$0xf]
        %v192 = vld [vmem:[%s189 + $0x8] sm:$0xf]
        %v193 = vld [vmem:[%s189 + $0xc] sm:$0xf]
        %v194 = vld [vmem:[%s189 + $0x10] sm:$0xf]
        %v195 = vld [vmem:[%s189 + $0x14] sm:$0xf]
        %v196 = vld [vmem:[%s189 + $0x18] sm:$0xf]
        %v197 = vld [vmem:[%s189 + $0x1c] sm:$0xf]
        %v198 = vld [vmem:[%s189 + $0x20] sm:$0xf]
        %v199 = vld [vmem:[%s189 + $0x24] sm:$0xf]
        %v200 = vld [vmem:[%s189 + $0x28] sm:$0xf]
        %v201 = vld [vmem:[%s189 + $0x2c] sm:$0xf]
        %v202 = vld [vmem:[%s189 + $0x30] sm:$0xf]
        %v203 = vld [vmem:[%s189 + $0x34] sm:$0xf]
        %v204 = vld [vmem:[%s189 + $0x38] sm:$0xf]
        %v205 = vld [vmem:[%s189 + $0x3c] sm:$0xf]
        %v206 = vld [vmem:[%s189 + $0x40] sm:$0xf]
        %v207 = vld [vmem:[%s189 + $0x44] sm:$0xf]
        %v208 = vld [vmem:[%s189 + $0x48] sm:$0xf]
        %v209 = vld [vmem:[%s189 + $0x4c] sm:$0xf]
        %v210 = vld [vmem:[%s189 + $0x50] sm:$0xf]
        %v211 = vld [vmem:[%s189 + $0x54] sm:$0xf]
        %v212 = vld [vmem:[%s189 + $0x58] sm:$0xf]
        %v213 = vld [vmem:[%s189 + $0x5c] sm:$0xf]
        %v214 = vld [vmem:[%s189 + $0x60] sm:$0xf]
        %v215 = vld [vmem:[%s189 + $0x64] sm:$0xf]
        %v216 = vld [vmem:[%s189 + $0x68] sm:$0xf]
        %v217 = vld [vmem:[%s189 + $0x6c] sm:$0xf]
        %v218 = vld [vmem:[%s189 + $0x70] sm:$0xf]
        %v219 = vld [vmem:[%s189 + $0x74] sm:$0xf]
        %v220 = vld [vmem:[%s189 + $0x78] sm:$0xf]
        %v221 = vld [vmem:[%s1] sm:$0x3]
        %s222 = scalar_lea.vmem %s1, 2
        %v223 = vld [vmem:[%s222] sm:$0x3]
        %v249 = vunpack.c.l.b16 %v190
        %v250 = vunpack.c.l.b16 %v191
        %v251 = vunpack.c.l.b16 %v192
        %v252 = vunpack.c.l.b16 %v193
        %v253 = vunpack.c.l.b16 %v194
        %v254 = vunpack.c.l.b16 %v195
        %v255 = vunpack.c.l.b16 %v196
        %v256 = vunpack.c.l.b16 %v197
        %v257 = vunpack.c.l.b16 %v198
        %v258 = vunpack.c.l.b16 %v199
        %v259 = vunpack.c.l.b16 %v200
        %v260 = vunpack.c.l.b16 %v201
        %v261 = vunpack.c.l.b16 %v202
        %v262 = vunpack.c.l.b16 %v203
        %v263 = vunpack.c.l.b16 %v204
        %v264 = vunpack.c.l.b16 %v205
        %v265 = vunpack.c.l.b16 %v206
        %v266 = vunpack.c.l.b16 %v207
        %v267 = vunpack.c.l.b16 %v208
        %v268 = vunpack.c.l.b16 %v209
        %v269 = vunpack.c.l.b16 %v210
        %v270 = vunpack.c.l.b16 %v211
        %v271 = vunpack.c.l.b16 %v212
        %v272 = vunpack.c.l.b16 %v213
        %v273 = vunpack.c.l.b16 %v214
        %v274 = vpack.c.b16 %v250, %v249
        %v275 = vpack.c.b16 %v252, %v251
        %v276 = vpack.c.b16 %v254, %v253
        %v277 = vpack.c.b16 %v256, %v255
        %v278 = vpack.c.b16 %v258, %v257
        %v279 = vpack.c.b16 %v260, %v259
        %v280 = vpack.c.b16 %v262, %v261
        %v281 = vpack.c.b16 %v264, %v263
        %v282 = vpack.c.b16 %v266, %v265
        %v283 = vpack.c.b16 %v268, %v267
        %v284 = vpack.c.b16 %v270, %v269
        %v285 = vpack.c.b16 %v272, %v271
        %v286 = vpack.c.b16 %v273, %v273
        %vm287 = vsmask.f32 7424
        %v289 = vshrl.u32 %v274, 16
        %v291 = vshll.u32 %v274, 16
        %v293 = vrot.slane %v291, 1
        %v294 = vor.u32 %v289, %v293
        %v296 = vshll.u32 %v275, 16
        %v298 = vrot.slane %v296, 1
        %v299 = vsel %vm287, %v294, %v298
        %v300 = vshrl.u32 %v275, 16
        %v302 = vor.u32 %v300, %v298
        %v304 = vshll.u32 %v276, 16
        %v306 = vrot.slane %v304, 1
        %v307 = vsel %vm287, %v302, %v306
        %v308 = vshrl.u32 %v276, 16
        %v310 = vor.u32 %v308, %v306
        %v312 = vshll.u32 %v277, 16
        %v314 = vrot.slane %v312, 1
        %v315 = vsel %vm287, %v310, %v314
        %v316 = vshrl.u32 %v277, 16
        %v318 = vor.u32 %v316, %v314
        %v320 = vshll.u32 %v278, 16
        %v322 = vrot.slane %v320, 1
        %v323 = vsel %vm287, %v318, %v322
        %v324 = vshrl.u32 %v278, 16
        %v326 = vor.u32 %v324, %v322
        %v328 = vshll.u32 %v279, 16
        %v330 = vrot.slane %v328, 1
        %v331 = vsel %vm287, %v326, %v330
        %v332 = vshrl.u32 %v279, 16
        %v334 = vor.u32 %v332, %v330
        %v336 = vshll.u32 %v280, 16
        %v338 = vrot.slane %v336, 1
        %v339 = vsel %vm287, %v334, %v338
        %v340 = vshrl.u32 %v280, 16
        %v342 = vor.u32 %v340, %v338
        %v344 = vshll.u32 %v281, 16
        %v346 = vrot.slane %v344, 1
        %v347 = vsel %vm287, %v342, %v346
        %v348 = vshrl.u32 %v281, 16
        %v350 = vor.u32 %v348, %v346
        %v352 = vshll.u32 %v282, 16
        %v354 = vrot.slane %v352, 1
        %v355 = vsel %vm287, %v350, %v354
        %v356 = vshrl.u32 %v282, 16
        %v358 = vor.u32 %v356, %v354
        %v360 = vshll.u32 %v283, 16
        %v362 = vrot.slane %v360, 1
        %v363 = vsel %vm287, %v358, %v362
        %v364 = vshrl.u32 %v283, 16
        %v366 = vor.u32 %v364, %v362
        %v368 = vshll.u32 %v284, 16
        %v370 = vrot.slane %v368, 1
        %v371 = vsel %vm287, %v366, %v370
        %v372 = vshrl.u32 %v284, 16
        %v374 = vor.u32 %v372, %v370
        %v376 = vshll.u32 %v285, 16
        %v378 = vrot.slane %v376, 1
        %v379 = vsel %vm287, %v374, %v378
        %v380 = vshrl.u32 %v285, 16
        %v382 = vor.u32 %v380, %v378
        %v384 = vshll.u32 %v286, 16
        %v386 = vrot.slane %v384, 1
        %v387 = vsel %vm287, %v382, %v386
        %vm388 = vcmask 31744
        %v390 = vsel %vm388, %v299, 0
        %v393 = vsel %vm388, %v307, 0
        %v396 = vsel %vm388, %v315, 0
        %v399 = vsel %vm388, %v323, 0
        %v402 = vsel %vm388, %v331, 0
        %v405 = vsel %vm388, %v339, 0
        %v408 = vsel %vm388, %v347, 0
        %v411 = vsel %vm388, %v355, 0
        %v414 = vsel %vm388, %v363, 0
        %v417 = vsel %vm388, %v371, 0
        %v420 = vsel %vm388, %v379, 0
        %v423 = vsel %vm388, %v387, 0
        %vm425 = vcmask 1041408
        %v427 = vsel %vm425, %v223, 0
        %429 = vmatprep.subr.bf16.mxu0 0
        %430 = vmatpush1.bf16.msra.mxu0 %v427
        %431 = vmatprep.subr.bf16.mxu0 0
        %432 = vmatpush1.bf16.msra.mxu0 0
        %433 = vmatprep.subr.bf16.mxu0 0
        %434 = vmatpush1.bf16.msra.mxu0 0
        %435 = vmatprep.subr.bf16.mxu0 0
        %436 = vmatpush1.bf16.msra.mxu0 0
        %437 = vmatprep.subr.bf16.mxu0 0
        %438 = vmatpush1.bf16.msra.mxu0 0
        %439 = vmatprep.subr.bf16.mxu0 0
        %440 = vmatpush1.bf16.msra.mxu0 0
        %441 = vmatprep.subr.bf16.mxu0 0
        %442 = vmatpush1.bf16.msra.mxu0 0
        %443 = vmatprep.subr.bf16.mxu0 0
        %444 = vmatpush1.bf16.msra.mxu0 0
        %445 = vmatprep.subr.bf16.mxu0 0
        %446 = vmatpush1.bf16.msra.mxu0 0
        %447 = vmatprep.subr.bf16.mxu0 0
        %448 = vmatpush1.bf16.msra.mxu0 0
        %449 = vmatprep.subr.bf16.mxu0 0
        %450 = vmatpush1.bf16.msra.mxu0 0
        %451 = vmatprep.subr.bf16.mxu0 0
        %452 = vmatpush1.bf16.msra.mxu0 0
        %453 = vmatprep.subr.bf16.mxu0 0
        %454 = vmatpush1.bf16.msra.mxu0 0
        %455 = vmatprep.subr.bf16.mxu0 0
        %456 = vmatpush1.bf16.msra.mxu0 0
        %457 = vmatprep.subr.bf16.mxu0 0
        %458 = vmatpush1.bf16.msra.mxu0 0
        %459 = vmatprep.subr.bf16.mxu0 0
        %460 = vmatpush1.bf16.msra.mxu0 0
        %461 = vmatprep.mubr.bf16.mxu0 0
        %462 = vmatmul.mubr.bf16.gmra.mrb[0].mxu0 %v390
        %v463 = vpop.f32.mrb[0].mxu0
        %v464 = vadd.f32 0.0, %v463
        %v465 = vpop.f32.mrb[0].mxu0
        %v466 = vpop.f32.mrb[0].mxu0
        %v467 = vadd.f32 0.0, %v466
        %v468 = vpop.f32.mrb[0].mxu0
        %469 = vmatprep.mubr.bf16.mxu0 0
        %470 = vmatmul.mubr.bf16.gmra.mrb[0].mxu0 %v393
        %v471 = vpop.f32.mrb[0].mxu0
        %v472 = vpop.f32.mrb[0].mxu0
        %v473 = vpop.f32.mrb[0].mxu0
        %v474 = vadd.f32 0.0, %v473
        %v475 = vpop.f32.mrb[0].mxu0
        %476 = vmatprep.mubr.bf16.mxu0 0
        %477 = vmatmul.mubr.bf16.gmra.mrb[0].mxu0 %v396
        %v478 = vpop.f32.mrb[0].mxu0
        %v479 = vadd.f32 0.0, %v478
        %v480 = vpop.f32.mrb[0].mxu0
        %v481 = vpop.f32.mrb[0].mxu0
        %v482 = vpop.f32.mrb[0].mxu0
        %483 = vmatprep.mubr.bf16.mxu0 0
        %484 = vmatmul.mubr.bf16.gmra.mrb[0].mxu0 %v399
        %v485 = vpop.f32.mrb[0].mxu0
        %v486 = vadd.f32 0.0, %v485
        %v487 = vpop.f32.mrb[0].mxu0
        %v488 = vpop.f32.mrb[0].mxu0
        %v489 = vadd.f32 0.0, %v488
        %v490 = vpop.f32.mrb[0].mxu0
        %491 = vmatprep.mubr.bf16.mxu0 0
        %492 = vmatmul.mubr.bf16.gmra.mrb[0].mxu0 %v402
        %v493 = vpop.f32.mrb[0].mxu0
        %v494 = vpop.f32.mrb[0].mxu0
        %v495 = vpop.f32.mrb[0].mxu0
        %v496 = vadd.f32 0.0, %v495
        %v497 = vpop.f32.mrb[0].mxu0
        %498 = vmatprep.mubr.bf16.mxu0 0
        %499 = vmatmul.mubr.bf16.gmra.mrb[0].mxu0 %v405
        %v500 = vpop.f32.mrb[0].mxu0
        %v501 = vadd.f32 0.0, %v500
        %v502 = vpop.f32.mrb[0].mxu0
        %v503 = vpop.f32.mrb[0].mxu0
        %v504 = vpop.f32.mrb[0].mxu0
        %505 = vmatprep.mubr.bf16.mxu0 0
        %506 = vmatmul.mubr.bf16.gmra.mrb[0].mxu0 %v408
        %v507 = vpop.f32.mrb[0].mxu0
        %v508 = vadd.f32 0.0, %v507
        %v509 = vpop.f32.mrb[0].mxu0
        %v510 = vpop.f32.mrb[0].mxu0
        %v511 = vadd.f32 0.0, %v510
        %v512 = vpop.f32.mrb[0].mxu0
        %513 = vmatprep.mubr.bf16.mxu0 0
        %514 = vmatmul.mubr.bf16.gmra.mrb[0].mxu0 %v411
        %v515 = vpop.f32.mrb[0].mxu0
        %v516 = vpop.f32.mrb[0].mxu0
        %v517 = vpop.f32.mrb[0].mxu0
        %v518 = vadd.f32 0.0, %v517
        %v519 = vpop.f32.mrb[0].mxu0
        %520 = vmatprep.mubr.bf16.mxu0 0
        %521 = vmatmul.mubr.bf16.gmra.mrb[0].mxu0 %v414
        %v522 = vpop.f32.mrb[0].mxu0
        %v523 = vadd.f32 0.0, %v522
        %v524 = vpop.f32.mrb[0].mxu0
        %v525 = vpop.f32.mrb[0].mxu0
        %v526 = vpop.f32.mrb[0].mxu0
        %527 = vmatprep.mubr.bf16.mxu0 0
        %528 = vmatmul.mubr.bf16.gmra.mrb[0].mxu0 %v417
        %v529 = vpop.f32.mrb[0].mxu0
        %v530 = vadd.f32 0.0, %v529
        %v531 = vpop.f32.mrb[0].mxu0
        %v532 = vpop.f32.mrb[0].mxu0
        %v533 = vadd.f32 0.0, %v532
        %v534 = vpop.f32.mrb[0].mxu0
        %535 = vmatprep.mubr.bf16.mxu0 0
        %536 = vmatmul.mubr.bf16.gmra.mrb[0].mxu0 %v420
        %v537 = vpop.f32.mrb[0].mxu0
        %v538 = vpop.f32.mrb[0].mxu0
        %v539 = vpop.f32.mrb[0].mxu0
        %v540 = vadd.f32 0.0, %v539
        %v541 = vpop.f32.mrb[0].mxu0
        %542 = vmatprep.mubr.bf16.mxu0 0
        %543 = vmatmul.mubr.bf16.gmra.mrb[0].mxu0 %v423
        %v544 = vpop.f32.mrb[0].mxu0
        %v545 = vadd.f32 0.0, %v544
        %v546 = vpop.f32.mrb[0].mxu0
        %v547 = vpop.f32.mrb[0].mxu0
        %v548 = vpop.f32.mrb[0].mxu0
        %549 = vdwg.mxu0
        %v550 = vsel %vm388, %v274, 0
        %v552 = vsel %vm388, %v275, 0
        %v554 = vsel %vm388, %v276, 0
        %v556 = vsel %vm388, %v277, 0
        %v558 = vsel %vm388, %v278, 0
        %v560 = vsel %vm388, %v279, 0
        %v562 = vsel %vm388, %v280, 0
        %v564 = vsel %vm388, %v281, 0
        %v566 = vsel %vm388, %v282, 0
        %v568 = vsel %vm388, %v283, 0
        %v570 = vsel %vm388, %v284, 0
        %v572 = vsel %vm388, %v285, 0
        %v575 = vsel %vm425, %v221, 0
        %577 = vmatprep.subr.bf16.mxu0 0
        %578 = vmatpush1.bf16.msra.mxu0 %v575
        %579 = vmatprep.subr.bf16.mxu0 0
        %580 = vmatpush1.bf16.msra.mxu0 0
        %581 = vmatprep.subr.bf16.mxu0 0
        %582 = vmatpush1.bf16.msra.mxu0 0
        %583 = vmatprep.subr.bf16.mxu0 0
        %584 = vmatpush1.bf16.msra.mxu0 0
        %585 = vmatprep.subr.bf16.mxu0 0
        %586 = vmatpush1.bf16.msra.mxu0 0
        %587 = vmatprep.subr.bf16.mxu0 0
        %588 = vmatpush1.bf16.msra.mxu0 0
        %589 = vmatprep.subr.bf16.mxu0 0
        %590 = vmatpush1.bf16.msra.mxu0 0
        %591 = vmatprep.subr.bf16.mxu0 0
        %592 = vmatpush1.bf16.msra.mxu0 0
        %593 = vmatprep.subr.bf16.mxu0 0
        %594 = vmatpush1.bf16.msra.mxu0 0
        %595 = vmatprep.subr.bf16.mxu0 0
        %596 = vmatpush1.bf16.msra.mxu0 0
        %597 = vmatprep.subr.bf16.mxu0 0
        %598 = vmatpush1.bf16.msra.mxu0 0
        %599 = vmatprep.subr.bf16.mxu0 0
        %600 = vmatpush1.bf16.msra.mxu0 0
        %601 = vmatprep.subr.bf16.mxu0 0
        %602 = vmatpush1.bf16.msra.mxu0 0
        %603 = vmatprep.subr.bf16.mxu0 0
        %604 = vmatpush1.bf16.msra.mxu0 0
        %605 = vmatprep.subr.bf16.mxu0 0
        %606 = vmatpush1.bf16.msra.mxu0 0
        %607 = vmatprep.subr.bf16.mxu0 0
        %608 = vmatpush1.bf16.msra.mxu0 0
        %609 = vmatprep.mubr.bf16.mxu0 0
        %610 = vmatmul.mubr.bf16.gmra.mrb[0].mxu0 %v550
        %v611 = vpop.f32.mrb[0].mxu0
        %v612 = vadd.f32 %v464, %v611
        %v613 = vpop.f32.mrb[0].mxu0
        %v614 = vpop.f32.mrb[0].mxu0
        %v615 = vadd.f32 %v467, %v614
        %v616 = vpop.f32.mrb[0].mxu0
        %617 = vmatprep.mubr.bf16.mxu0 0
        %618 = vmatmul.mubr.bf16.gmra.mrb[0].mxu0 %v552
        %v619 = vpop.f32.mrb[0].mxu0
        %v620 = vpop.f32.mrb[0].mxu0
        %v621 = vpop.f32.mrb[0].mxu0
        %v622 = vadd.f32 %v474, %v621
        %v623 = vpop.f32.mrb[0].mxu0
        %624 = vmatprep.mubr.bf16.mxu0 0
        %625 = vmatmul.mubr.bf16.gmra.mrb[0].mxu0 %v554
        %v626 = vpop.f32.mrb[0].mxu0
        %v627 = vadd.f32 %v479, %v626
        %v628 = vpop.f32.mrb[0].mxu0
        %v629 = vpop.f32.mrb[0].mxu0
        %v630 = vpop.f32.mrb[0].mxu0
        %631 = vmatprep.mubr.bf16.mxu0 0
        %632 = vmatmul.mubr.bf16.gmra.mrb[0].mxu0 %v556
        %v633 = vpop.f32.mrb[0].mxu0
        %v634 = vadd.f32 %v486, %v633
        %v635 = vpop.f32.mrb[0].mxu0
        %v636 = vpop.f32.mrb[0].mxu0
        %v637 = vadd.f32 %v489, %v636
        %v638 = vpop.f32.mrb[0].mxu0
        %639 = vmatprep.mubr.bf16.mxu0 0
        %640 = vmatmul.mubr.bf16.gmra.mrb[0].mxu0 %v558
        %v641 = vpop.f32.mrb[0].mxu0
        %v642 = vpop.f32.mrb[0].mxu0
        %v643 = vpop.f32.mrb[0].mxu0
        %v644 = vadd.f32 %v496, %v643
        %v645 = vpop.f32.mrb[0].mxu0
        %646 = vmatprep.mubr.bf16.mxu0 0
        %647 = vmatmul.mubr.bf16.gmra.mrb[0].mxu0 %v560
        %v648 = vpop.f32.mrb[0].mxu0
        %v649 = vadd.f32 %v501, %v648
        %v650 = vpop.f32.mrb[0].mxu0
        %v651 = vpop.f32.mrb[0].mxu0
        %v652 = vpop.f32.mrb[0].mxu0
        %653 = vmatprep.mubr.bf16.mxu0 0
        %654 = vmatmul.mubr.bf16.gmra.mrb[0].mxu0 %v562
        %v655 = vpop.f32.mrb[0].mxu0
        %v656 = vadd.f32 %v508, %v655
        %v657 = vpop.f32.mrb[0].mxu0
        %v658 = vpop.f32.mrb[0].mxu0
        %v659 = vadd.f32 %v511, %v658
        %v660 = vpop.f32.mrb[0].mxu0
        %661 = vmatprep.mubr.bf16.mxu0 0
        %662 = vmatmul.mubr.bf16.gmra.mrb[0].mxu0 %v564
        %v663 = vpop.f32.mrb[0].mxu0
        %v664 = vpop.f32.mrb[0].mxu0
        %v665 = vpop.f32.mrb[0].mxu0
        %v666 = vadd.f32 %v518, %v665
        %v667 = vpop.f32.mrb[0].mxu0
        %668 = vmatprep.mubr.bf16.mxu0 0
        %669 = vmatmul.mubr.bf16.gmra.mrb[0].mxu0 %v566
        %v670 = vpop.f32.mrb[0].mxu0
        %v671 = vadd.f32 %v523, %v670
        %v672 = vpop.f32.mrb[0].mxu0
        %v673 = vpop.f32.mrb[0].mxu0
        %v674 = vpop.f32.mrb[0].mxu0
        %675 = vmatprep.mubr.bf16.mxu0 0
        %676 = vmatmul.mubr.bf16.gmra.mrb[0].mxu0 %v568
        %v677 = vpop.f32.mrb[0].mxu0
        %v678 = vadd.f32 %v530, %v677
        %v679 = vpop.f32.mrb[0].mxu0
        %v680 = vpop.f32.mrb[0].mxu0
        %v681 = vadd.f32 %v533, %v680
        %v682 = vpop.f32.mrb[0].mxu0
        %683 = vmatprep.mubr.bf16.mxu0 0
        %684 = vmatmul.mubr.bf16.gmra.mrb[0].mxu0 %v570
        %v685 = vpop.f32.mrb[0].mxu0
        %v686 = vpop.f32.mrb[0].mxu0
        %v687 = vpop.f32.mrb[0].mxu0
        %v688 = vadd.f32 %v540, %v687
        %v689 = vpop.f32.mrb[0].mxu0
        %690 = vmatprep.mubr.bf16.mxu0 0
        %691 = vmatmul.mubr.bf16.gmra.mrb[0].mxu0 %v572
        %v692 = vpop.f32.mrb[0].mxu0
        %v693 = vadd.f32 %v545, %v692
        %v694 = vpop.f32.mrb[0].mxu0
        %v695 = vpop.f32.mrb[0].mxu0
        %v696 = vpop.f32.mrb[0].mxu0
        %697 = vdwg.mxu0
        %s698 = scalar_lea.vmem %s1, 4
        %v699 = vld [vmem:[%s698] sm:$0x3]
        %vm700 = vcmask 1046528
        %v701 = vrot.slane %v274, 1
        %v702 = vrot.slane %v275, 1
        %v703 = vsel %vm700, %v701, %v702
        %v704 = vrot.slane %v276, 1
        %v705 = vsel %vm700, %v702, %v704
        %v706 = vrot.slane %v277, 1
        %v707 = vsel %vm700, %v704, %v706
        %v708 = vrot.slane %v278, 1
        %v709 = vsel %vm700, %v706, %v708
        %v710 = vrot.slane %v279, 1
        %v711 = vsel %vm700, %v708, %v710
        %v712 = vrot.slane %v280, 1
        %v713 = vsel %vm700, %v710, %v712
        %v714 = vrot.slane %v281, 1
        %v715 = vsel %vm700, %v712, %v714
        %v716 = vrot.slane %v282, 1
        %v717 = vsel %vm700, %v714, %v716
        %v718 = vrot.slane %v283, 1
        %v719 = vsel %vm700, %v716, %v718
        %v720 = vrot.slane %v284, 1
        %v721 = vsel %vm700, %v718, %v720
        %v722 = vrot.slane %v285, 1
        %v723 = vsel %vm700, %v720, %v722
        %v724 = vrot.slane %v286, 1
        %v725 = vsel %vm700, %v722, %v724
        %v727 = vsel %vm388, %v703, 0
        %v730 = vsel %vm388, %v705, 0
        %v733 = vsel %vm388, %v707, 0
        %v736 = vsel %vm388, %v709, 0
        %v739 = vsel %vm388, %v711, 0
        %v742 = vsel %vm388, %v713, 0
        %v745 = vsel %vm388, %v715, 0
        %v748 = vsel %vm388, %v717, 0
        %v751 = vsel %vm388, %v719, 0
        %v754 = vsel %vm388, %v721, 0
        %v757 = vsel %vm388, %v723, 0
        %v760 = vsel %vm388, %v725, 0
        %v763 = vsel %vm425, %v699, 0
        %765 = vmatprep.subr.bf16.mxu0 0
        %766 = vmatpush1.bf16.msra.mxu0 %v763
        %767 = vmatprep.subr.bf16.mxu0 0
        %768 = vmatpush1.bf16.msra.mxu0 0
        %769 = vmatprep.subr.bf16.mxu0 0
        %770 = vmatpush1.bf16.msra.mxu0 0
        %771 = vmatprep.subr.bf16.mxu0 0
        %772 = vmatpush1.bf16.msra.mxu0 0
        %773 = vmatprep.subr.bf16.mxu0 0
        %774 = vmatpush1.bf16.msra.mxu0 0
        %775 = vmatprep.subr.bf16.mxu0 0
        %776 = vmatpush1.bf16.msra.mxu0 0
        %777 = vmatprep.subr.bf16.mxu0 0
        %778 = vmatpush1.bf16.msra.mxu0 0
        %779 = vmatprep.subr.bf16.mxu0 0
        %780 = vmatpush1.bf16.msra.mxu0 0
        %781 = vmatprep.subr.bf16.mxu0 0
        %782 = vmatpush1.bf16.msra.mxu0 0
        %783 = vmatprep.subr.bf16.mxu0 0
        %784 = vmatpush1.bf16.msra.mxu0 0
        %785 = vmatprep.subr.bf16.mxu0 0
        %786 = vmatpush1.bf16.msra.mxu0 0
        %787 = vmatprep.subr.bf16.mxu0 0
        %788 = vmatpush1.bf16.msra.mxu0 0
        %789 = vmatprep.subr.bf16.mxu0 0
        %790 = vmatpush1.bf16.msra.mxu0 0
        %791 = vmatprep.subr.bf16.mxu0 0
        %792 = vmatpush1.bf16.msra.mxu0 0
        %793 = vmatprep.subr.bf16.mxu0 0
        %794 = vmatpush1.bf16.msra.mxu0 0
        %795 = vmatprep.subr.bf16.mxu0 0
        %796 = vmatpush1.bf16.msra.mxu0 0
        %797 = vmatprep.mubr.bf16.mxu0 0
        %798 = vmatmul.mubr.bf16.gmra.mrb[0].mxu0 %v727
        %v799 = vpop.f32.mrb[0].mxu0
        %v800 = vadd.f32 0.0, %v799
        %v801 = vpop.f32.mrb[0].mxu0
        %v802 = vpop.f32.mrb[0].mxu0
        %v803 = vadd.f32 0.0, %v802
        %v804 = vpop.f32.mrb[0].mxu0
        %805 = vmatprep.mubr.bf16.mxu0 0
        %806 = vmatmul.mubr.bf16.gmra.mrb[0].mxu0 %v730
        %v807 = vpop.f32.mrb[0].mxu0
        %v808 = vpop.f32.mrb[0].mxu0
        %v809 = vpop.f32.mrb[0].mxu0
        %v810 = vadd.f32 0.0, %v809
        %v811 = vpop.f32.mrb[0].mxu0
        %812 = vmatprep.mubr.bf16.mxu0 0
        %813 = vmatmul.mubr.bf16.gmra.mrb[0].mxu0 %v733
        %v814 = vpop.f32.mrb[0].mxu0
        %v815 = vadd.f32 0.0, %v814
        %v816 = vpop.f32.mrb[0].mxu0
        %v817 = vpop.f32.mrb[0].mxu0
        %v818 = vpop.f32.mrb[0].mxu0
        %819 = vmatprep.mubr.bf16.mxu0 0
        %820 = vmatmul.mubr.bf16.gmra.mrb[0].mxu0 %v736
        %v821 = vpop.f32.mrb[0].mxu0
        %v822 = vadd.f32 0.0, %v821
        %v823 = vpop.f32.mrb[0].mxu0
        %v824 = vpop.f32.mrb[0].mxu0
        %v825 = vadd.f32 0.0, %v824
        %v826 = vpop.f32.mrb[0].mxu0
        %827 = vmatprep.mubr.bf16.mxu0 0
        %828 = vmatmul.mubr.bf16.gmra.mrb[0].mxu0 %v739
        %v829 = vpop.f32.mrb[0].mxu0
        %v830 = vpop.f32.mrb[0].mxu0
        %v831 = vpop.f32.mrb[0].mxu0
        %v832 = vadd.f32 0.0, %v831
        %v833 = vpop.f32.mrb[0].mxu0
        %834 = vmatprep.mubr.bf16.mxu0 0
        %835 = vmatmul.mubr.bf16.gmra.mrb[0].mxu0 %v742
        %v836 = vpop.f32.mrb[0].mxu0
        %v837 = vadd.f32 0.0, %v836
        %v838 = vpop.f32.mrb[0].mxu0
        %v839 = vpop.f32.mrb[0].mxu0
        %v840 = vpop.f32.mrb[0].mxu0
        %841 = vmatprep.mubr.bf16.mxu0 0
        %842 = vmatmul.mubr.bf16.gmra.mrb[0].mxu0 %v745
        %v843 = vpop.f32.mrb[0].mxu0
        %v844 = vadd.f32 0.0, %v843
        %v845 = vpop.f32.mrb[0].mxu0
        %v846 = vpop.f32.mrb[0].mxu0
        %v847 = vadd.f32 0.0, %v846
        %v848 = vpop.f32.mrb[0].mxu0
        %849 = vmatprep.mubr.bf16.mxu0 0
        %850 = vmatmul.mubr.bf16.gmra.mrb[0].mxu0 %v748
        %v851 = vpop.f32.mrb[0].mxu0
        %v852 = vpop.f32.mrb[0].mxu0
        %v853 = vpop.f32.mrb[0].mxu0
        %v854 = vadd.f32 0.0, %v853
        %v855 = vpop.f32.mrb[0].mxu0
        %856 = vmatprep.mubr.bf16.mxu0 0
        %857 = vmatmul.mubr.bf16.gmra.mrb[0].mxu0 %v751
        %v858 = vpop.f32.mrb[0].mxu0
        %v859 = vadd.f32 0.0, %v858
        %v860 = vpop.f32.mrb[0].mxu0
        %v861 = vpop.f32.mrb[0].mxu0
        %v862 = vpop.f32.mrb[0].mxu0
        %863 = vmatprep.mubr.bf16.mxu0 0
        %864 = vmatmul.mubr.bf16.gmra.mrb[0].mxu0 %v754
        %v865 = vpop.f32.mrb[0].mxu0
        %v866 = vadd.f32 0.0, %v865
        %v867 = vpop.f32.mrb[0].mxu0
        %v868 = vpop.f32.mrb[0].mxu0
        %v869 = vadd.f32 0.0, %v868
        %v870 = vpop.f32.mrb[0].mxu0
        %871 = vmatprep.mubr.bf16.mxu0 0
        %872 = vmatmul.mubr.bf16.gmra.mrb[0].mxu0 %v757
        %v873 = vpop.f32.mrb[0].mxu0
        %v874 = vpop.f32.mrb[0].mxu0
        %v875 = vpop.f32.mrb[0].mxu0
        %v876 = vadd.f32 0.0, %v875
        %v877 = vpop.f32.mrb[0].mxu0
        %878 = vmatprep.mubr.bf16.mxu0 0
        %879 = vmatmul.mubr.bf16.gmra.mrb[0].mxu0 %v760
        %v880 = vpop.f32.mrb[0].mxu0
        %v881 = vadd.f32 0.0, %v880
        %v882 = vpop.f32.mrb[0].mxu0
        %v883 = vpop.f32.mrb[0].mxu0
        %v884 = vpop.f32.mrb[0].mxu0
        %885 = vdwg.mxu0
        %v886 = vadd.f32 %v612, %v800
        %v887 = vadd.f32 %v615, %v803
        %v888 = vadd.f32 %v622, %v810
        %v889 = vadd.f32 %v627, %v815
        %v890 = vadd.f32 %v634, %v822
        %v891 = vadd.f32 %v637, %v825
        %v892 = vadd.f32 %v644, %v832
        %v893 = vadd.f32 %v649, %v837
        %v894 = vadd.f32 %v656, %v844
        %v895 = vadd.f32 %v659, %v847
        %v896 = vadd.f32 %v666, %v854
        %v897 = vadd.f32 %v671, %v859
        %v898 = vadd.f32 %v678, %v866
        %v899 = vadd.f32 %v681, %v869
        %v900 = vadd.f32 %v688, %v876
        %v901 = vadd.f32 %v693, %v881
        %s902 = scalar_lea.vmem %s1, 6
        %v903 = vld [vmem:[%s902] sm:$0x3]
        %v906 = vunpack.c.l.b16 %v215
        %v907 = vunpack.c.l.b16 %v216
        %v908 = vpack.c.b16 %v253, %v252
        %v909 = vpack.c.b16 %v255, %v254
        %v910 = vpack.c.b16 %v257, %v256
        %v911 = vpack.c.b16 %v259, %v258
        %v912 = vpack.c.b16 %v261, %v260
        %v913 = vpack.c.b16 %v263, %v262
        %v914 = vpack.c.b16 %v265, %v264
        %v915 = vpack.c.b16 %v267, %v266
        %v916 = vpack.c.b16 %v269, %v268
        %v917 = vpack.c.b16 %v271, %v270
        %v918 = vpack.c.b16 %v273, %v272
        %v919 = vpack.c.b16 %v907, %v906
        %v921 = vsel %vm388, %v908, 0
        %v924 = vsel %vm388, %v909, 0
        %v927 = vsel %vm388, %v910, 0
        %v930 = vsel %vm388, %v911, 0
        %v933 = vsel %vm388, %v912, 0
        %v936 = vsel %vm388, %v913, 0
        %v939 = vsel %vm388, %v914, 0
        %v942 = vsel %vm388, %v915, 0
        %v945 = vsel %vm388, %v916, 0
        %v948 = vsel %vm388, %v917, 0
        %v951 = vsel %vm388, %v918, 0
        %v954 = vsel %vm388, %v919, 0
        %v957 = vsel %vm425, %v903, 0
        %959 = vmatprep.subr.bf16.mxu0 0
        %960 = vmatpush1.bf16.msra.mxu0 %v957
        %961 = vmatprep.subr.bf16.mxu0 0
        %962 = vmatpush1.bf16.msra.mxu0 0
        %963 = vmatprep.subr.bf16.mxu0 0
        %964 = vmatpush1.bf16.msra.mxu0 0
        %965 = vmatprep.subr.bf16.mxu0 0
        %966 = vmatpush1.bf16.msra.mxu0 0
        %967 = vmatprep.subr.bf16.mxu0 0
        %968 = vmatpush1.bf16.msra.mxu0 0
        %969 = vmatprep.subr.bf16.mxu0 0
        %970 = vmatpush1.bf16.msra.mxu0 0
        %971 = vmatprep.subr.bf16.mxu0 0
        %972 = vmatpush1.bf16.msra.mxu0 0
        %973 = vmatprep.subr.bf16.mxu0 0
        %974 = vmatpush1.bf16.msra.mxu0 0
        %975 = vmatprep.subr.bf16.mxu0 0
        %976 = vmatpush1.bf16.msra.mxu0 0
        %977 = vmatprep.subr.bf16.mxu0 0
        %978 = vmatpush1.bf16.msra.mxu0 0
        %979 = vmatprep.subr.bf16.mxu0 0
        %980 = vmatpush1.bf16.msra.mxu0 0
        %981 = vmatprep.subr.bf16.mxu0 0
        %982 = vmatpush1.bf16.msra.mxu0 0
        %983 = vmatprep.subr.bf16.mxu0 0
        %984 = vmatpush1.bf16.msra.mxu0 0
        %985 = vmatprep.subr.bf16.mxu0 0
        %986 = vmatpush1.bf16.msra.mxu0 0
        %987 = vmatprep.subr.bf16.mxu0 0
        %988 = vmatpush1.bf16.msra.mxu0 0
        %989 = vmatprep.subr.bf16.mxu0 0
        %990 = vmatpush1.bf16.msra.mxu0 0
        %991 = vmatprep.mubr.bf16.mxu0 0
        %992 = vmatmul.mubr.bf16.gmra.mrb[0].mxu0 %v921
        %v993 = vpop.f32.mrb[0].mxu0
        %v994 = vadd.f32 0.0, %v993
        %v995 = vpop.f32.mrb[0].mxu0
        %v996 = vpop.f32.mrb[0].mxu0
        %v997 = vadd.f32 0.0, %v996
        %v998 = vpop.f32.mrb[0].mxu0
        %999 = vmatprep.mubr.bf16.mxu0 0
        %1000 = vmatmul.mubr.bf16.gmra.mrb[0].mxu0 %v924
        %v1001 = vpop.f32.mrb[0].mxu0
        %v1002 = vpop.f32.mrb[0].mxu0
        %v1003 = vpop.f32.mrb[0].mxu0
        %v1004 = vadd.f32 0.0, %v1003
        %v1005 = vpop.f32.mrb[0].mxu0
        %1006 = vmatprep.mubr.bf16.mxu0 0
        %1007 = vmatmul.mubr.bf16.gmra.mrb[0].mxu0 %v927
        %v1008 = vpop.f32.mrb[0].mxu0
        %v1009 = vadd.f32 0.0, %v1008
        %v1010 = vpop.f32.mrb[0].mxu0
        %v1011 = vpop.f32.mrb[0].mxu0
        %v1012 = vpop.f32.mrb[0].mxu0
        %1013 = vmatprep.mubr.bf16.mxu0 0
        %1014 = vmatmul.mubr.bf16.gmra.mrb[0].mxu0 %v930
        %v1015 = vpop.f32.mrb[0].mxu0
        %v1016 = vadd.f32 0.0, %v1015
        %v1017 = vpop.f32.mrb[0].mxu0
        %v1018 = vpop.f32.mrb[0].mxu0
        %v1019 = vadd.f32 0.0, %v1018
        %v1020 = vpop.f32.mrb[0].mxu0
        %1021 = vmatprep.mubr.bf16.mxu0 0
        %1022 = vmatmul.mubr.bf16.gmra.mrb[0].mxu0 %v933
        %v1023 = vpop.f32.mrb[0].mxu0
        %v1024 = vpop.f32.mrb[0].mxu0
        %v1025 = vpop.f32.mrb[0].mxu0
        %v1026 = vadd.f32 0.0, %v1025
        %v1027 = vpop.f32.mrb[0].mxu0
        %1028 = vmatprep.mubr.bf16.mxu0 0
        %1029 = vmatmul.mubr.bf16.gmra.mrb[0].mxu0 %v936
        %v1030 = vpop.f32.mrb[0].mxu0
        %v1031 = vadd.f32 0.0, %v1030
        %v1032 = vpop.f32.mrb[0].mxu0
        %v1033 = vpop.f32.mrb[0].mxu0
        %v1034 = vpop.f32.mrb[0].mxu0
        %1035 = vmatprep.mubr.bf16.mxu0 0
        %1036 = vmatmul.mubr.bf16.gmra.mrb[0].mxu0 %v939
        %v1037 = vpop.f32.mrb[0].mxu0
        %v1038 = vadd.f32 0.0, %v1037
        %v1039 = vpop.f32.mrb[0].mxu0
        %v1040 = vpop.f32.mrb[0].mxu0
        %v1041 = vadd.f32 0.0, %v1040
        %v1042 = vpop.f32.mrb[0].mxu0
        %1043 = vmatprep.mubr.bf16.mxu0 0
        %1044 = vmatmul.mubr.bf16.gmra.mrb[0].mxu0 %v942
        %v1045 = vpop.f32.mrb[0].mxu0
        %v1046 = vpop.f32.mrb[0].mxu0
        %v1047 = vpop.f32.mrb[0].mxu0
        %v1048 = vadd.f32 0.0, %v1047
        %v1049 = vpop.f32.mrb[0].mxu0
        %1050 = vmatprep.mubr.bf16.mxu0 0
        %1051 = vmatmul.mubr.bf16.gmra.mrb[0].mxu0 %v945
        %v1052 = vpop.f32.mrb[0].mxu0
        %v1053 = vadd.f32 0.0, %v1052
        %v1054 = vpop.f32.mrb[0].mxu0
        %v1055 = vpop.f32.mrb[0].mxu0
        %v1056 = vpop.f32.mrb[0].mxu0
        %1057 = vmatprep.mubr.bf16.mxu0 0
        %1058 = vmatmul.mubr.bf16.gmra.mrb[0].mxu0 %v948
        %v1059 = vpop.f32.mrb[0].mxu0
        %v1060 = vadd.f32 0.0, %v1059
        %v1061 = vpop.f32.mrb[0].mxu0
        %v1062 = vpop.f32.mrb[0].mxu0
        %v1063 = vadd.f32 0.0, %v1062
        %v1064 = vpop.f32.mrb[0].mxu0
        %1065 = vmatprep.mubr.bf16.mxu0 0
        %1066 = vmatmul.mubr.bf16.gmra.mrb[0].mxu0 %v951
        %v1067 = vpop.f32.mrb[0].mxu0
        %v1068 = vpop.f32.mrb[0].mxu0
        %v1069 = vpop.f32.mrb[0].mxu0
        %v1070 = vadd.f32 0.0, %v1069
        %v1071 = vpop.f32.mrb[0].mxu0
        %1072 = vmatprep.mubr.bf16.mxu0 0
        %1073 = vmatmul.mubr.bf16.gmra.mrb[0].mxu0 %v954
        %v1074 = vpop.f32.mrb[0].mxu0
        %v1075 = vadd.f32 0.0, %v1074
        %v1076 = vpop.f32.mrb[0].mxu0
        %v1077 = vpop.f32.mrb[0].mxu0
        %v1078 = vpop.f32.mrb[0].mxu0
        %1079 = vdwg.mxu0
        %v1080 = vadd.f32 %v886, %v994
        %v1081 = vadd.f32 %v887, %v997
        %v1082 = vadd.f32 %v888, %v1004
        %v1083 = vadd.f32 %v889, %v1009
        %v1084 = vadd.f32 %v890, %v1016
        %v1085 = vadd.f32 %v891, %v1019
        %v1086 = vadd.f32 %v892, %v1026
        %v1087 = vadd.f32 %v893, %v1031
        %v1088 = vadd.f32 %v894, %v1038
        %v1089 = vadd.f32 %v895, %v1041
        %v1090 = vadd.f32 %v896, %v1048
        %v1091 = vadd.f32 %v897, %v1053
        %v1092 = vadd.f32 %v898, %v1060
        %v1093 = vadd.f32 %v899, %v1063
        %v1094 = vadd.f32 %v900, %v1070
        %v1095 = vadd.f32 %v901, %v1075
        %s1096 = scalar_lea.vmem %s1, 8
        %v1097 = vld [vmem:[%s1096] sm:$0x3]
        %v1099 = vunpack.c.l.b16 %v217
        %v1100 = vpack.c.b16 %v1099, %v1099
        %v1101 = vshrl.u32 %v908, 16
        %v1103 = vshll.u32 %v908, 16
        %v1105 = vrot.slane %v1103, 1
        %v1106 = vor.u32 %v1101, %v1105
        %v1107 = vshll.u32 %v909, 16
        %v1109 = vrot.slane %v1107, 1
        %v1110 = vsel %vm287, %v1106, %v1109
        %v1111 = vshrl.u32 %v909, 16
        %v1113 = vor.u32 %v1111, %v1109
        %v1114 = vshll.u32 %v910, 16
        %v1116 = vrot.slane %v1114, 1
        %v1117 = vsel %vm287, %v1113, %v1116
        %v1118 = vshrl.u32 %v910, 16
        %v1120 = vor.u32 %v1118, %v1116
        %v1121 = vshll.u32 %v911, 16
        %v1123 = vrot.slane %v1121, 1
        %v1124 = vsel %vm287, %v1120, %v1123
        %v1125 = vshrl.u32 %v911, 16
        %v1127 = vor.u32 %v1125, %v1123
        %v1128 = vshll.u32 %v912, 16
        %v1130 = vrot.slane %v1128, 1
        %v1131 = vsel %vm287, %v1127, %v1130
        %v1132 = vshrl.u32 %v912, 16
        %v1134 = vor.u32 %v1132, %v1130
        %v1135 = vshll.u32 %v913, 16
        %v1137 = vrot.slane %v1135, 1
        %v1138 = vsel %vm287, %v1134, %v1137
        %v1139 = vshrl.u32 %v913, 16
        %v1141 = vor.u32 %v1139, %v1137
        %v1142 = vshll.u32 %v914, 16
        %v1144 = vrot.slane %v1142, 1
        %v1145 = vsel %vm287, %v1141, %v1144
        %v1146 = vshrl.u32 %v914, 16
        %v1148 = vor.u32 %v1146, %v1144
        %v1149 = vshll.u32 %v915, 16
        %v1151 = vrot.slane %v1149, 1
        %v1152 = vsel %vm287, %v1148, %v1151
        %v1153 = vshrl.u32 %v915, 16
        %v1155 = vor.u32 %v1153, %v1151
        %v1156 = vshll.u32 %v916, 16
        %v1158 = vrot.slane %v1156, 1
        %v1159 = vsel %vm287, %v1155, %v1158
        %v1160 = vshrl.u32 %v916, 16
        %v1162 = vor.u32 %v1160, %v1158
        %v1163 = vshll.u32 %v917, 16
        %v1165 = vrot.slane %v1163, 1
        %v1166 = vsel %vm287, %v1162, %v1165
        %v1167 = vshrl.u32 %v917, 16
        %v1169 = vor.u32 %v1167, %v1165
        %v1170 = vshll.u32 %v918, 16
        %v1172 = vrot.slane %v1170, 1
        %v1173 = vsel %vm287, %v1169, %v1172
        %v1174 = vshrl.u32 %v918, 16
        %v1176 = vor.u32 %v1174, %v1172
        %v1177 = vshll.u32 %v919, 16
        %v1179 = vrot.slane %v1177, 1
        %v1180 = vsel %vm287, %v1176, %v1179
        %v1181 = vshrl.u32 %v919, 16
        %v1183 = vor.u32 %v1181, %v1179
        %v1185 = vshll.u32 %v1100, 16
        %v1187 = vrot.slane %v1185, 1
        %v1188 = vsel %vm287, %v1183, %v1187
        %v1190 = vsel %vm388, %v1110, 0
        %v1193 = vsel %vm388, %v1117, 0
        %v1196 = vsel %vm388, %v1124, 0
        %v1199 = vsel %vm388, %v1131, 0
        %v1202 = vsel %vm388, %v1138, 0
        %v1205 = vsel %vm388, %v1145, 0
        %v1208 = vsel %vm388, %v1152, 0
        %v1211 = vsel %vm388, %v1159, 0
        %v1214 = vsel %vm388, %v1166, 0
        %v1217 = vsel %vm388, %v1173, 0
        %v1220 = vsel %vm388, %v1180, 0
        %v1223 = vsel %vm388, %v1188, 0
        %v1226 = vsel %vm425, %v1097, 0
        %1228 = vmatprep.subr.bf16.mxu0 0
        %1229 = vmatpush1.bf16.msra.mxu0 %v1226
        %1230 = vmatprep.subr.bf16.mxu0 0
        %1231 = vmatpush1.bf16.msra.mxu0 0
        %1232 = vmatprep.subr.bf16.mxu0 0
        %1233 = vmatpush1.bf16.msra.mxu0 0
        %1234 = vmatprep.subr.bf16.mxu0 0
        %1235 = vmatpush1.bf16.msra.mxu0 0
        %1236 = vmatprep.subr.bf16.mxu0 0
        %1237 = vmatpush1.bf16.msra.mxu0 0
        %1238 = vmatprep.subr.bf16.mxu0 0
        %1239 = vmatpush1.bf16.msra.mxu0 0
        %1240 = vmatprep.subr.bf16.mxu0 0
        %1241 = vmatpush1.bf16.msra.mxu0 0
        %1242 = vmatprep.subr.bf16.mxu0 0
        %1243 = vmatpush1.bf16.msra.mxu0 0
        %1244 = vmatprep.subr.bf16.mxu0 0
        %1245 = vmatpush1.bf16.msra.mxu0 0
        %1246 = vmatprep.subr.bf16.mxu0 0
        %1247 = vmatpush1.bf16.msra.mxu0 0
        %1248 = vmatprep.subr.bf16.mxu0 0
        %1249 = vmatpush1.bf16.msra.mxu0 0
        %1250 = vmatprep.subr.bf16.mxu0 0
        %1251 = vmatpush1.bf16.msra.mxu0 0
        %1252 = vmatprep.subr.bf16.mxu0 0
        %1253 = vmatpush1.bf16.msra.mxu0 0
        %1254 = vmatprep.subr.bf16.mxu0 0
        %1255 = vmatpush1.bf16.msra.mxu0 0
        %1256 = vmatprep.subr.bf16.mxu0 0
        %1257 = vmatpush1.bf16.msra.mxu0 0
        %1258 = vmatprep.subr.bf16.mxu0 0
        %1259 = vmatpush1.bf16.msra.mxu0 0
        %1260 = vmatprep.mubr.bf16.mxu0 0
        %1261 = vmatmul.mubr.bf16.gmra.mrb[0].mxu0 %v1190
        %v1262 = vpop.f32.mrb[0].mxu0
        %v1263 = vadd.f32 0.0, %v1262
        %v1264 = vpop.f32.mrb[0].mxu0
        %v1265 = vpop.f32.mrb[0].mxu0
        %v1266 = vadd.f32 0.0, %v1265
        %v1267 = vpop.f32.mrb[0].mxu0
        %1268 = vmatprep.mubr.bf16.mxu0 0
        %1269 = vmatmul.mubr.bf16.gmra.mrb[0].mxu0 %v1193
        %v1270 = vpop.f32.mrb[0].mxu0
        %v1271 = vpop.f32.mrb[0].mxu0
        %v1272 = vpop.f32.mrb[0].mxu0
        %v1273 = vadd.f32 0.0, %v1272
        %v1274 = vpop.f32.mrb[0].mxu0
        %1275 = vmatprep.mubr.bf16.mxu0 0
        %1276 = vmatmul.mubr.bf16.gmra.mrb[0].mxu0 %v1196
        %v1277 = vpop.f32.mrb[0].mxu0
        %v1278 = vadd.f32 0.0, %v1277
        %v1279 = vpop.f32.mrb[0].mxu0
        %v1280 = vpop.f32.mrb[0].mxu0
        %v1281 = vpop.f32.mrb[0].mxu0
        %1282 = vmatprep.mubr.bf16.mxu0 0
        %1283 = vmatmul.mubr.bf16.gmra.mrb[0].mxu0 %v1199
        %v1284 = vpop.f32.mrb[0].mxu0
        %v1285 = vadd.f32 0.0, %v1284
        %v1286 = vpop.f32.mrb[0].mxu0
        %v1287 = vpop.f32.mrb[0].mxu0
        %v1288 = vadd.f32 0.0, %v1287
        %v1289 = vpop.f32.mrb[0].mxu0
        %1290 = vmatprep.mubr.bf16.mxu0 0
        %1291 = vmatmul.mubr.bf16.gmra.mrb[0].mxu0 %v1202
        %v1292 = vpop.f32.mrb[0].mxu0
        %v1293 = vpop.f32.mrb[0].mxu0
        %v1294 = vpop.f32.mrb[0].mxu0
        %v1295 = vadd.f32 0.0, %v1294
        %v1296 = vpop.f32.mrb[0].mxu0
        %1297 = vmatprep.mubr.bf16.mxu0 0
        %1298 = vmatmul.mubr.bf16.gmra.mrb[0].mxu0 %v1205
        %v1299 = vpop.f32.mrb[0].mxu0
        %v1300 = vadd.f32 0.0, %v1299
        %v1301 = vpop.f32.mrb[0].mxu0
        %v1302 = vpop.f32.mrb[0].mxu0
        %v1303 = vpop.f32.mrb[0].mxu0
        %1304 = vmatprep.mubr.bf16.mxu0 0
        %1305 = vmatmul.mubr.bf16.gmra.mrb[0].mxu0 %v1208
        %v1306 = vpop.f32.mrb[0].mxu0
        %v1307 = vadd.f32 0.0, %v1306
        %v1308 = vpop.f32.mrb[0].mxu0
        %v1309 = vpop.f32.mrb[0].mxu0
        %v1310 = vadd.f32 0.0, %v1309
        %v1311 = vpop.f32.mrb[0].mxu0
        %1312 = vmatprep.mubr.bf16.mxu0 0
        %1313 = vmatmul.mubr.bf16.gmra.mrb[0].mxu0 %v1211
        %v1314 = vpop.f32.mrb[0].mxu0
        %v1315 = vpop.f32.mrb[0].mxu0
        %v1316 = vpop.f32.mrb[0].mxu0
        %v1317 = vadd.f32 0.0, %v1316
        %v1318 = vpop.f32.mrb[0].mxu0
        %1319 = vmatprep.mubr.bf16.mxu0 0
        %1320 = vmatmul.mubr.bf16.gmra.mrb[0].mxu0 %v1214
        %v1321 = vpop.f32.mrb[0].mxu0
        %v1322 = vadd.f32 0.0, %v1321
        %v1323 = vpop.f32.mrb[0].mxu0
        %v1324 = vpop.f32.mrb[0].mxu0
        %v1325 = vpop.f32.mrb[0].mxu0
        %1326 = vmatprep.mubr.bf16.mxu0 0
        %1327 = vmatmul.mubr.bf16.gmra.mrb[0].mxu0 %v1217
        %v1328 = vpop.f32.mrb[0].mxu0
        %v1329 = vadd.f32 0.0, %v1328
        %v1330 = vpop.f32.mrb[0].mxu0
        %v1331 = vpop.f32.mrb[0].mxu0
        %v1332 = vadd.f32 0.0, %v1331
        %v1333 = vpop.f32.mrb[0].mxu0
        %1334 = vmatprep.mubr.bf16.mxu0 0
        %1335 = vmatmul.mubr.bf16.gmra.mrb[0].mxu0 %v1220
        %v1336 = vpop.f32.mrb[0].mxu0
        %v1337 = vpop.f32.mrb[0].mxu0
        %v1338 = vpop.f32.mrb[0].mxu0
        %v1339 = vadd.f32 0.0, %v1338
        %v1340 = vpop.f32.mrb[0].mxu0
        %1341 = vmatprep.mubr.bf16.mxu0 0
        %1342 = vmatmul.mubr.bf16.gmra.mrb[0].mxu0 %v1223
        %v1343 = vpop.f32.mrb[0].mxu0
        %v1344 = vadd.f32 0.0, %v1343
        %v1345 = vpop.f32.mrb[0].mxu0
        %v1346 = vpop.f32.mrb[0].mxu0
        %v1347 = vpop.f32.mrb[0].mxu0
        %1348 = vdwg.mxu0
        %v1349 = vadd.f32 %v1080, %v1263
        %v1350 = vadd.f32 %v1081, %v1266
        %v1351 = vadd.f32 %v1082, %v1273
        %v1352 = vadd.f32 %v1083, %v1278
        %v1353 = vadd.f32 %v1084, %v1285
        %v1354 = vadd.f32 %v1085, %v1288
        %v1355 = vadd.f32 %v1086, %v1295
        %v1356 = vadd.f32 %v1087, %v1300
        %v1357 = vadd.f32 %v1088, %v1307
        %v1358 = vadd.f32 %v1089, %v1310
        %v1359 = vadd.f32 %v1090, %v1317
        %v1360 = vadd.f32 %v1091, %v1322
        %v1361 = vadd.f32 %v1092, %v1329
        %v1362 = vadd.f32 %v1093, %v1332
        %v1363 = vadd.f32 %v1094, %v1339
        %v1364 = vadd.f32 %v1095, %v1344
        %s1365 = scalar_lea.vmem %s1, 10
        %v1366 = vld [vmem:[%s1365] sm:$0x3]
        %v1367 = vrot.slane %v908, 1
        %v1368 = vrot.slane %v909, 1
        %v1369 = vsel %vm700, %v1367, %v1368
        %v1370 = vrot.slane %v910, 1
        %v1371 = vsel %vm700, %v1368, %v1370
        %v1372 = vrot.slane %v911, 1
        %v1373 = vsel %vm700, %v1370, %v1372
        %v1374 = vrot.slane %v912, 1
        %v1375 = vsel %vm700, %v1372, %v1374
        %v1376 = vrot.slane %v913, 1
        %v1377 = vsel %vm700, %v1374, %v1376
        %v1378 = vrot.slane %v914, 1
        %v1379 = vsel %vm700, %v1376, %v1378
        %v1380 = vrot.slane %v915, 1
        %v1381 = vsel %vm700, %v1378, %v1380
        %v1382 = vrot.slane %v916, 1
        %v1383 = vsel %vm700, %v1380, %v1382
        %v1384 = vrot.slane %v917, 1
        %v1385 = vsel %vm700, %v1382, %v1384
        %v1386 = vrot.slane %v918, 1
        %v1387 = vsel %vm700, %v1384, %v1386
        %v1388 = vrot.slane %v919, 1
        %v1389 = vsel %vm700, %v1386, %v1388
        %v1390 = vrot.slane %v1100, 1
        %v1391 = vsel %vm700, %v1388, %v1390
        %v1393 = vsel %vm388, %v1369, 0
        %v1396 = vsel %vm388, %v1371, 0
        %v1399 = vsel %vm388, %v1373, 0
        %v1402 = vsel %vm388, %v1375, 0
        %v1405 = vsel %vm388, %v1377, 0
        %v1408 = vsel %vm388, %v1379, 0
        %v1411 = vsel %vm388, %v1381, 0
        %v1414 = vsel %vm388, %v1383, 0
        %v1417 = vsel %vm388, %v1385, 0
        %v1420 = vsel %vm388, %v1387, 0
        %v1423 = vsel %vm388, %v1389, 0
        %v1426 = vsel %vm388, %v1391, 0
        %v1429 = vsel %vm425, %v1366, 0
        %1431 = vmatprep.subr.bf16.mxu0 0
        %1432 = vmatpush1.bf16.msra.mxu0 %v1429
        %1433 = vmatprep.subr.bf16.mxu0 0
        %1434 = vmatpush1.bf16.msra.mxu0 0
        %1435 = vmatprep.subr.bf16.mxu0 0
        %1436 = vmatpush1.bf16.msra.mxu0 0
        %1437 = vmatprep.subr.bf16.mxu0 0
        %1438 = vmatpush1.bf16.msra.mxu0 0
        %1439 = vmatprep.subr.bf16.mxu0 0
        %1440 = vmatpush1.bf16.msra.mxu0 0
        %1441 = vmatprep.subr.bf16.mxu0 0
        %1442 = vmatpush1.bf16.msra.mxu0 0
        %1443 = vmatprep.subr.bf16.mxu0 0
        %1444 = vmatpush1.bf16.msra.mxu0 0
        %1445 = vmatprep.subr.bf16.mxu0 0
        %1446 = vmatpush1.bf16.msra.mxu0 0
        %1447 = vmatprep.subr.bf16.mxu0 0
        %1448 = vmatpush1.bf16.msra.mxu0 0
        %1449 = vmatprep.subr.bf16.mxu0 0
        %1450 = vmatpush1.bf16.msra.mxu0 0
        %1451 = vmatprep.subr.bf16.mxu0 0
        %1452 = vmatpush1.bf16.msra.mxu0 0
        %1453 = vmatprep.subr.bf16.mxu0 0
        %1454 = vmatpush1.bf16.msra.mxu0 0
        %1455 = vmatprep.subr.bf16.mxu0 0
        %1456 = vmatpush1.bf16.msra.mxu0 0
        %1457 = vmatprep.subr.bf16.mxu0 0
        %1458 = vmatpush1.bf16.msra.mxu0 0
        %1459 = vmatprep.subr.bf16.mxu0 0
        %1460 = vmatpush1.bf16.msra.mxu0 0
        %1461 = vmatprep.subr.bf16.mxu0 0
        %1462 = vmatpush1.bf16.msra.mxu0 0
        %1463 = vmatprep.mubr.bf16.mxu0 0
        %1464 = vmatmul.mubr.bf16.gmra.mrb[0].mxu0 %v1393
        %v1465 = vpop.f32.mrb[0].mxu0
        %v1466 = vadd.f32 0.0, %v1465
        %v1467 = vpop.f32.mrb[0].mxu0
        %v1468 = vpop.f32.mrb[0].mxu0
        %v1469 = vadd.f32 0.0, %v1468
        %v1470 = vpop.f32.mrb[0].mxu0
        %1471 = vmatprep.mubr.bf16.mxu0 0
        %1472 = vmatmul.mubr.bf16.gmra.mrb[0].mxu0 %v1396
        %v1473 = vpop.f32.mrb[0].mxu0
        %v1474 = vpop.f32.mrb[0].mxu0
        %v1475 = vpop.f32.mrb[0].mxu0
        %v1476 = vadd.f32 0.0, %v1475
        %v1477 = vpop.f32.mrb[0].mxu0
        %1478 = vmatprep.mubr.bf16.mxu0 0
        %1479 = vmatmul.mubr.bf16.gmra.mrb[0].mxu0 %v1399
        %v1480 = vpop.f32.mrb[0].mxu0
        %v1481 = vadd.f32 0.0, %v1480
        %v1482 = vpop.f32.mrb[0].mxu0
        %v1483 = vpop.f32.mrb[0].mxu0
        %v1484 = vpop.f32.mrb[0].mxu0
        %1485 = vmatprep.mubr.bf16.mxu0 0
        %1486 = vmatmul.mubr.bf16.gmra.mrb[0].mxu0 %v1402
        %v1487 = vpop.f32.mrb[0].mxu0
        %v1488 = vadd.f32 0.0, %v1487
        %v1489 = vpop.f32.mrb[0].mxu0
        %v1490 = vpop.f32.mrb[0].mxu0
        %v1491 = vadd.f32 0.0, %v1490
        %v1492 = vpop.f32.mrb[0].mxu0
        %1493 = vmatprep.mubr.bf16.mxu0 0
        %1494 = vmatmul.mubr.bf16.gmra.mrb[0].mxu0 %v1405
        %v1495 = vpop.f32.mrb[0].mxu0
        %v1496 = vpop.f32.mrb[0].mxu0
        %v1497 = vpop.f32.mrb[0].mxu0
        %v1498 = vadd.f32 0.0, %v1497
        %v1499 = vpop.f32.mrb[0].mxu0
        %1500 = vmatprep.mubr.bf16.mxu0 0
        %1501 = vmatmul.mubr.bf16.gmra.mrb[0].mxu0 %v1408
        %v1502 = vpop.f32.mrb[0].mxu0
        %v1503 = vadd.f32 0.0, %v1502
        %v1504 = vpop.f32.mrb[0].mxu0
        %v1505 = vpop.f32.mrb[0].mxu0
        %v1506 = vpop.f32.mrb[0].mxu0
        %1507 = vmatprep.mubr.bf16.mxu0 0
        %1508 = vmatmul.mubr.bf16.gmra.mrb[0].mxu0 %v1411
        %v1509 = vpop.f32.mrb[0].mxu0
        %v1510 = vadd.f32 0.0, %v1509
        %v1511 = vpop.f32.mrb[0].mxu0
        %v1512 = vpop.f32.mrb[0].mxu0
        %v1513 = vadd.f32 0.0, %v1512
        %v1514 = vpop.f32.mrb[0].mxu0
        %1515 = vmatprep.mubr.bf16.mxu0 0
        %1516 = vmatmul.mubr.bf16.gmra.mrb[0].mxu0 %v1414
        %v1517 = vpop.f32.mrb[0].mxu0
        %v1518 = vpop.f32.mrb[0].mxu0
        %v1519 = vpop.f32.mrb[0].mxu0
        %v1520 = vadd.f32 0.0, %v1519
        %v1521 = vpop.f32.mrb[0].mxu0
        %1522 = vmatprep.mubr.bf16.mxu0 0
        %1523 = vmatmul.mubr.bf16.gmra.mrb[0].mxu0 %v1417
        %v1524 = vpop.f32.mrb[0].mxu0
        %v1525 = vadd.f32 0.0, %v1524
        %v1526 = vpop.f32.mrb[0].mxu0
        %v1527 = vpop.f32.mrb[0].mxu0
        %v1528 = vpop.f32.mrb[0].mxu0
        %1529 = vmatprep.mubr.bf16.mxu0 0
        %1530 = vmatmul.mubr.bf16.gmra.mrb[0].mxu0 %v1420
        %v1531 = vpop.f32.mrb[0].mxu0
        %v1532 = vadd.f32 0.0, %v1531
        %v1533 = vpop.f32.mrb[0].mxu0
        %v1534 = vpop.f32.mrb[0].mxu0
        %v1535 = vadd.f32 0.0, %v1534
        %v1536 = vpop.f32.mrb[0].mxu0
        %1537 = vmatprep.mubr.bf16.mxu0 0
        %1538 = vmatmul.mubr.bf16.gmra.mrb[0].mxu0 %v1423
        %v1539 = vpop.f32.mrb[0].mxu0
        %v1540 = vpop.f32.mrb[0].mxu0
        %v1541 = vpop.f32.mrb[0].mxu0
        %v1542 = vadd.f32 0.0, %v1541
        %v1543 = vpop.f32.mrb[0].mxu0
        %1544 = vmatprep.mubr.bf16.mxu0 0
        %1545 = vmatmul.mubr.bf16.gmra.mrb[0].mxu0 %v1426
        %v1546 = vpop.f32.mrb[0].mxu0
        %v1547 = vadd.f32 0.0, %v1546
        %v1548 = vpop.f32.mrb[0].mxu0
        %v1549 = vpop.f32.mrb[0].mxu0
        %v1550 = vpop.f32.mrb[0].mxu0
        %1551 = vdwg.mxu0
        %v1552 = vadd.f32 %v1349, %v1466
        %v1553 = vadd.f32 %v1350, %v1469
        %v1554 = vadd.f32 %v1351, %v1476
        %v1555 = vadd.f32 %v1352, %v1481
        %v1556 = vadd.f32 %v1353, %v1488
        %v1557 = vadd.f32 %v1354, %v1491
        %v1558 = vadd.f32 %v1355, %v1498
        %v1559 = vadd.f32 %v1356, %v1503
        %v1560 = vadd.f32 %v1357, %v1510
        %v1561 = vadd.f32 %v1358, %v1513
        %v1562 = vadd.f32 %v1359, %v1520
        %v1563 = vadd.f32 %v1360, %v1525
        %v1564 = vadd.f32 %v1361, %v1532
        %v1565 = vadd.f32 %v1362, %v1535
        %v1566 = vadd.f32 %v1363, %v1542
        %v1567 = vadd.f32 %v1364, %v1547
        %s1568 = scalar_lea.vmem %s1, 12
        %v1569 = vld [vmem:[%s1568] sm:$0x3]
        %v1572 = vunpack.c.l.b16 %v218
        %v1573 = vunpack.c.l.b16 %v219
        %v1574 = vpack.c.b16 %v906, %v273
        %v1575 = vpack.c.b16 %v1099, %v907
        %v1576 = vpack.c.b16 %v1573, %v1572
        %v1578 = vsel %vm388, %v1574, 0
        %v1581 = vsel %vm388, %v1575, 0
        %v1584 = vsel %vm388, %v1576, 0
        %v1587 = vsel %vm425, %v1569, 0
        %1589 = vmatprep.subr.bf16.mxu0 0
        %1590 = vmatpush1.bf16.msra.mxu0 %v1587
        %1591 = vmatprep.subr.bf16.mxu0 0
        %1592 = vmatpush1.bf16.msra.mxu0 0
        %1593 = vmatprep.subr.bf16.mxu0 0
        %1594 = vmatpush1.bf16.msra.mxu0 0
        %1595 = vmatprep.subr.bf16.mxu0 0
        %1596 = vmatpush1.bf16.msra.mxu0 0
        %1597 = vmatprep.subr.bf16.mxu0 0
        %1598 = vmatpush1.bf16.msra.mxu0 0
        %1599 = vmatprep.subr.bf16.mxu0 0
        %1600 = vmatpush1.bf16.msra.mxu0 0
        %1601 = vmatprep.subr.bf16.mxu0 0
        %1602 = vmatpush1.bf16.msra.mxu0 0
        %1603 = vmatprep.subr.bf16.mxu0 0
        %1604 = vmatpush1.bf16.msra.mxu0 0
        %1605 = vmatprep.subr.bf16.mxu0 0
        %1606 = vmatpush1.bf16.msra.mxu0 0
        %1607 = vmatprep.subr.bf16.mxu0 0
        %1608 = vmatpush1.bf16.msra.mxu0 0
        %1609 = vmatprep.subr.bf16.mxu0 0
        %1610 = vmatpush1.bf16.msra.mxu0 0
        %1611 = vmatprep.subr.bf16.mxu0 0
        %1612 = vmatpush1.bf16.msra.mxu0 0
        %1613 = vmatprep.subr.bf16.mxu0 0
        %1614 = vmatpush1.bf16.msra.mxu0 0
        %1615 = vmatprep.subr.bf16.mxu0 0
        %1616 = vmatpush1.bf16.msra.mxu0 0
        %1617 = vmatprep.subr.bf16.mxu0 0
        %1618 = vmatpush1.bf16.msra.mxu0 0
        %1619 = vmatprep.subr.bf16.mxu0 0
        %1620 = vmatpush1.bf16.msra.mxu0 0
        %1621 = vmatprep.mubr.bf16.mxu0 0
        %1622 = vmatmul.mubr.bf16.gmra.mrb[0].mxu0 %v556
        %v1623 = vpop.f32.mrb[0].mxu0
        %v1624 = vadd.f32 0.0, %v1623
        %v1625 = vpop.f32.mrb[0].mxu0
        %v1626 = vpop.f32.mrb[0].mxu0
        %v1627 = vadd.f32 0.0, %v1626
        %v1628 = vpop.f32.mrb[0].mxu0
        %1629 = vmatprep.mubr.bf16.mxu0 0
        %1630 = vmatmul.mubr.bf16.gmra.mrb[0].mxu0 %v558
        %v1631 = vpop.f32.mrb[0].mxu0
        %v1632 = vpop.f32.mrb[0].mxu0
        %v1633 = vpop.f32.mrb[0].mxu0
        %v1634 = vadd.f32 0.0, %v1633
        %v1635 = vpop.f32.mrb[0].mxu0
        %1636 = vmatprep.mubr.bf16.mxu0 0
        %1637 = vmatmul.mubr.bf16.gmra.mrb[0].mxu0 %v560
        %v1638 = vpop.f32.mrb[0].mxu0
        %v1639 = vadd.f32 0.0, %v1638
        %v1640 = vpop.f32.mrb[0].mxu0
        %v1641 = vpop.f32.mrb[0].mxu0
        %v1642 = vpop.f32.mrb[0].mxu0
        %1643 = vmatprep.mubr.bf16.mxu0 0
        %1644 = vmatmul.mubr.bf16.gmra.mrb[0].mxu0 %v562
        %v1645 = vpop.f32.mrb[0].mxu0
        %v1646 = vadd.f32 0.0, %v1645
        %v1647 = vpop.f32.mrb[0].mxu0
        %v1648 = vpop.f32.mrb[0].mxu0
        %v1649 = vadd.f32 0.0, %v1648
        %v1650 = vpop.f32.mrb[0].mxu0
        %1651 = vmatprep.mubr.bf16.mxu0 0
        %1652 = vmatmul.mubr.bf16.gmra.mrb[0].mxu0 %v564
        %v1653 = vpop.f32.mrb[0].mxu0
        %v1654 = vpop.f32.mrb[0].mxu0
        %v1655 = vpop.f32.mrb[0].mxu0
        %v1656 = vadd.f32 0.0, %v1655
        %v1657 = vpop.f32.mrb[0].mxu0
        %1658 = vmatprep.mubr.bf16.mxu0 0
        %1659 = vmatmul.mubr.bf16.gmra.mrb[0].mxu0 %v566
        %v1660 = vpop.f32.mrb[0].mxu0
        %v1661 = vadd.f32 0.0, %v1660
        %v1662 = vpop.f32.mrb[0].mxu0
        %v1663 = vpop.f32.mrb[0].mxu0
        %v1664 = vpop.f32.mrb[0].mxu0
        %1665 = vmatprep.mubr.bf16.mxu0 0
        %1666 = vmatmul.mubr.bf16.gmra.mrb[0].mxu0 %v568
        %v1667 = vpop.f32.mrb[0].mxu0
        %v1668 = vadd.f32 0.0, %v1667
        %v1669 = vpop.f32.mrb[0].mxu0
        %v1670 = vpop.f32.mrb[0].mxu0
        %v1671 = vadd.f32 0.0, %v1670
        %v1672 = vpop.f32.mrb[0].mxu0
        %1673 = vmatprep.mubr.bf16.mxu0 0
        %1674 = vmatmul.mubr.bf16.gmra.mrb[0].mxu0 %v570
        %v1675 = vpop.f32.mrb[0].mxu0
        %v1676 = vpop.f32.mrb[0].mxu0
        %v1677 = vpop.f32.mrb[0].mxu0
        %v1678 = vadd.f32 0.0, %v1677
        %v1679 = vpop.f32.mrb[0].mxu0
        %1680 = vmatprep.mubr.bf16.mxu0 0
        %1681 = vmatmul.mubr.bf16.gmra.mrb[0].mxu0 %v572
        %v1682 = vpop.f32.mrb[0].mxu0
        %v1683 = vadd.f32 0.0, %v1682
        %v1684 = vpop.f32.mrb[0].mxu0
        %v1685 = vpop.f32.mrb[0].mxu0
        %v1686 = vpop.f32.mrb[0].mxu0
        %1687 = vmatprep.mubr.bf16.mxu0 0
        %1688 = vmatmul.mubr.bf16.gmra.mrb[0].mxu0 %v1578
        %v1689 = vpop.f32.mrb[0].mxu0
        %v1690 = vadd.f32 0.0, %v1689
        %v1691 = vpop.f32.mrb[0].mxu0
        %v1692 = vpop.f32.mrb[0].mxu0
        %v1693 = vadd.f32 0.0, %v1692
        %v1694 = vpop.f32.mrb[0].mxu0
        %1695 = vmatprep.mubr.bf16.mxu0 0
        %1696 = vmatmul.mubr.bf16.gmra.mrb[0].mxu0 %v1581
        %v1697 = vpop.f32.mrb[0].mxu0
        %v1698 = vpop.f32.mrb[0].mxu0
        %v1699 = vpop.f32.mrb[0].mxu0
        %v1700 = vadd.f32 0.0, %v1699
        %v1701 = vpop.f32.mrb[0].mxu0
        %1702 = vmatprep.mubr.bf16.mxu0 0
        %1703 = vmatmul.mubr.bf16.gmra.mrb[0].mxu0 %v1584
        %v1704 = vpop.f32.mrb[0].mxu0
        %v1705 = vadd.f32 0.0, %v1704
        %v1706 = vpop.f32.mrb[0].mxu0
        %v1707 = vpop.f32.mrb[0].mxu0
        %v1708 = vpop.f32.mrb[0].mxu0
        %1709 = vdwg.mxu0
        %v1710 = vadd.f32 %v1552, %v1624
        %v1711 = vadd.f32 %v1553, %v1627
        %v1712 = vadd.f32 %v1554, %v1634
        %v1713 = vadd.f32 %v1555, %v1639
        %v1714 = vadd.f32 %v1556, %v1646
        %v1715 = vadd.f32 %v1557, %v1649
        %v1716 = vadd.f32 %v1558, %v1656
        %v1717 = vadd.f32 %v1559, %v1661
        %v1718 = vadd.f32 %v1560, %v1668
        %v1719 = vadd.f32 %v1561, %v1671
        %v1720 = vadd.f32 %v1562, %v1678
        %v1721 = vadd.f32 %v1563, %v1683
        %v1722 = vadd.f32 %v1564, %v1690
        %v1723 = vadd.f32 %v1565, %v1693
        %v1724 = vadd.f32 %v1566, %v1700
        %v1725 = vadd.f32 %v1567, %v1705
        %s1726 = scalar_lea.vmem %s1, 14
        %v1727 = vld [vmem:[%s1726] sm:$0x3]
        %v1729 = vunpack.c.l.b16 %v220
        %v1730 = vpack.c.b16 %v1729, %v1729
        %v1731 = vshll.u32 %v1574, 16
        %v1733 = vrot.slane %v1731, 1
        %v1734 = vsel %vm287, %v382, %v1733
        %v1735 = vshrl.u32 %v1574, 16
        %v1737 = vor.u32 %v1735, %v1733
        %v1738 = vshll.u32 %v1575, 16
        %v1740 = vrot.slane %v1738, 1
        %v1741 = vsel %vm287, %v1737, %v1740
        %v1742 = vshrl.u32 %v1575, 16
        %v1744 = vor.u32 %v1742, %v1740
        %v1745 = vshll.u32 %v1576, 16
        %v1747 = vrot.slane %v1745, 1
        %v1748 = vsel %vm287, %v1744, %v1747
        %v1749 = vshrl.u32 %v1576, 16
        %v1751 = vor.u32 %v1749, %v1747
        %v1753 = vshll.u32 %v1730, 16
        %v1755 = vrot.slane %v1753, 1
        %v1756 = vsel %vm287, %v1751, %v1755
        %v1758 = vsel %vm388, %v1734, 0
        %v1761 = vsel %vm388, %v1741, 0
        %v1764 = vsel %vm388, %v1748, 0
        %v1767 = vsel %vm388, %v1756, 0
        %v1770 = vsel %vm425, %v1727, 0
        %1772 = vmatprep.subr.bf16.mxu0 0
        %1773 = vmatpush1.bf16.msra.mxu0 %v1770
        %1774 = vmatprep.subr.bf16.mxu0 0
        %1775 = vmatpush1.bf16.msra.mxu0 0
        %1776 = vmatprep.subr.bf16.mxu0 0
        %1777 = vmatpush1.bf16.msra.mxu0 0
        %1778 = vmatprep.subr.bf16.mxu0 0
        %1779 = vmatpush1.bf16.msra.mxu0 0
        %1780 = vmatprep.subr.bf16.mxu0 0
        %1781 = vmatpush1.bf16.msra.mxu0 0
        %1782 = vmatprep.subr.bf16.mxu0 0
        %1783 = vmatpush1.bf16.msra.mxu0 0
        %1784 = vmatprep.subr.bf16.mxu0 0
        %1785 = vmatpush1.bf16.msra.mxu0 0
        %1786 = vmatprep.subr.bf16.mxu0 0
        %1787 = vmatpush1.bf16.msra.mxu0 0
        %1788 = vmatprep.subr.bf16.mxu0 0
        %1789 = vmatpush1.bf16.msra.mxu0 0
        %1790 = vmatprep.subr.bf16.mxu0 0
        %1791 = vmatpush1.bf16.msra.mxu0 0
        %1792 = vmatprep.subr.bf16.mxu0 0
        %1793 = vmatpush1.bf16.msra.mxu0 0
        %1794 = vmatprep.subr.bf16.mxu0 0
        %1795 = vmatpush1.bf16.msra.mxu0 0
        %1796 = vmatprep.subr.bf16.mxu0 0
        %1797 = vmatpush1.bf16.msra.mxu0 0
        %1798 = vmatprep.subr.bf16.mxu0 0
        %1799 = vmatpush1.bf16.msra.mxu0 0
        %1800 = vmatprep.subr.bf16.mxu0 0
        %1801 = vmatpush1.bf16.msra.mxu0 0
        %1802 = vmatprep.subr.bf16.mxu0 0
        %1803 = vmatpush1.bf16.msra.mxu0 0
        %1804 = vmatprep.mubr.bf16.mxu0 0
        %1805 = vmatmul.mubr.bf16.gmra.mrb[0].mxu0 %v399
        %v1806 = vpop.f32.mrb[0].mxu0
        %v1807 = vadd.f32 0.0, %v1806
        %v1808 = vpop.f32.mrb[0].mxu0
        %v1809 = vpop.f32.mrb[0].mxu0
        %v1810 = vadd.f32 0.0, %v1809
        %v1811 = vpop.f32.mrb[0].mxu0
        %1812 = vmatprep.mubr.bf16.mxu0 0
        %1813 = vmatmul.mubr.bf16.gmra.mrb[0].mxu0 %v402
        %v1814 = vpop.f32.mrb[0].mxu0
        %v1815 = vpop.f32.mrb[0].mxu0
        %v1816 = vpop.f32.mrb[0].mxu0
        %v1817 = vadd.f32 0.0, %v1816
        %v1818 = vpop.f32.mrb[0].mxu0
        %1819 = vmatprep.mubr.bf16.mxu0 0
        %1820 = vmatmul.mubr.bf16.gmra.mrb[0].mxu0 %v405
        %v1821 = vpop.f32.mrb[0].mxu0
        %v1822 = vadd.f32 0.0, %v1821
        %v1823 = vpop.f32.mrb[0].mxu0
        %v1824 = vpop.f32.mrb[0].mxu0
        %v1825 = vpop.f32.mrb[0].mxu0
        %1826 = vmatprep.mubr.bf16.mxu0 0
        %1827 = vmatmul.mubr.bf16.gmra.mrb[0].mxu0 %v408
        %v1828 = vpop.f32.mrb[0].mxu0
        %v1829 = vadd.f32 0.0, %v1828
        %v1830 = vpop.f32.mrb[0].mxu0
        %v1831 = vpop.f32.mrb[0].mxu0
        %v1832 = vadd.f32 0.0, %v1831
        %v1833 = vpop.f32.mrb[0].mxu0
        %1834 = vmatprep.mubr.bf16.mxu0 0
        %1835 = vmatmul.mubr.bf16.gmra.mrb[0].mxu0 %v411
        %v1836 = vpop.f32.mrb[0].mxu0
        %v1837 = vpop.f32.mrb[0].mxu0
        %v1838 = vpop.f32.mrb[0].mxu0
        %v1839 = vadd.f32 0.0, %v1838
        %v1840 = vpop.f32.mrb[0].mxu0
        %1841 = vmatprep.mubr.bf16.mxu0 0
        %1842 = vmatmul.mubr.bf16.gmra.mrb[0].mxu0 %v414
        %v1843 = vpop.f32.mrb[0].mxu0
        %v1844 = vadd.f32 0.0, %v1843
        %v1845 = vpop.f32.mrb[0].mxu0
        %v1846 = vpop.f32.mrb[0].mxu0
        %v1847 = vpop.f32.mrb[0].mxu0
        %1848 = vmatprep.mubr.bf16.mxu0 0
        %1849 = vmatmul.mubr.bf16.gmra.mrb[0].mxu0 %v417
        %v1850 = vpop.f32.mrb[0].mxu0
        %v1851 = vadd.f32 0.0, %v1850
        %v1852 = vpop.f32.mrb[0].mxu0
        %v1853 = vpop.f32.mrb[0].mxu0
        %v1854 = vadd.f32 0.0, %v1853
        %v1855 = vpop.f32.mrb[0].mxu0
        %1856 = vmatprep.mubr.bf16.mxu0 0
        %1857 = vmatmul.mubr.bf16.gmra.mrb[0].mxu0 %v420
        %v1858 = vpop.f32.mrb[0].mxu0
        %v1859 = vpop.f32.mrb[0].mxu0
        %v1860 = vpop.f32.mrb[0].mxu0
        %v1861 = vadd.f32 0.0, %v1860
        %v1862 = vpop.f32.mrb[0].mxu0
        %1863 = vmatprep.mubr.bf16.mxu0 0
        %1864 = vmatmul.mubr.bf16.gmra.mrb[0].mxu0 %v1758
        %v1865 = vpop.f32.mrb[0].mxu0
        %v1866 = vadd.f32 0.0, %v1865
        %v1867 = vpop.f32.mrb[0].mxu0
        %v1868 = vpop.f32.mrb[0].mxu0
        %v1869 = vpop.f32.mrb[0].mxu0
        %1870 = vmatprep.mubr.bf16.mxu0 0
        %1871 = vmatmul.mubr.bf16.gmra.mrb[0].mxu0 %v1761
        %v1872 = vpop.f32.mrb[0].mxu0
        %v1873 = vadd.f32 0.0, %v1872
        %v1874 = vpop.f32.mrb[0].mxu0
        %v1875 = vpop.f32.mrb[0].mxu0
        %v1876 = vadd.f32 0.0, %v1875
        %v1877 = vpop.f32.mrb[0].mxu0
        %1878 = vmatprep.mubr.bf16.mxu0 0
        %1879 = vmatmul.mubr.bf16.gmra.mrb[0].mxu0 %v1764
        %v1880 = vpop.f32.mrb[0].mxu0
        %v1881 = vpop.f32.mrb[0].mxu0
        %v1882 = vpop.f32.mrb[0].mxu0
        %v1883 = vadd.f32 0.0, %v1882
        %v1884 = vpop.f32.mrb[0].mxu0
        %1885 = vmatprep.mubr.bf16.mxu0 0
        %1886 = vmatmul.mubr.bf16.gmra.mrb[0].mxu0 %v1767
        %v1887 = vpop.f32.mrb[0].mxu0
        %v1888 = vadd.f32 0.0, %v1887
        %v1889 = vpop.f32.mrb[0].mxu0
        %v1890 = vpop.f32.mrb[0].mxu0
        %v1891 = vpop.f32.mrb[0].mxu0
        %1892 = vdwg.mxu0
        %v1893 = vadd.f32 %v1710, %v1807
        %v1894 = vadd.f32 %v1711, %v1810
        %v1895 = vadd.f32 %v1712, %v1817
        %v1896 = vadd.f32 %v1713, %v1822
        %v1897 = vadd.f32 %v1714, %v1829
        %v1898 = vadd.f32 %v1715, %v1832
        %v1899 = vadd.f32 %v1716, %v1839
        %v1900 = vadd.f32 %v1717, %v1844
        %v1901 = vadd.f32 %v1718, %v1851
        %v1902 = vadd.f32 %v1719, %v1854
        %v1903 = vadd.f32 %v1720, %v1861
        %v1904 = vadd.f32 %v1721, %v1866
        %v1905 = vadd.f32 %v1722, %v1873
        %v1906 = vadd.f32 %v1723, %v1876
        %v1907 = vadd.f32 %v1724, %v1883
        %v1908 = vadd.f32 %v1725, %v1888
        %s1909 = scalar_lea.vmem %s1, 16
        %v1910 = vld [vmem:[%s1909] sm:$0x3]
        %v1911 = vrot.slane %v1574, 1
        %v1912 = vsel %vm700, %v722, %v1911
        %v1913 = vrot.slane %v1575, 1
        %v1914 = vsel %vm700, %v1911, %v1913
        %v1915 = vrot.slane %v1576, 1
        %v1916 = vsel %vm700, %v1913, %v1915
        %v1917 = vrot.slane %v1730, 1
        %v1918 = vsel %vm700, %v1915, %v1917
        %v1920 = vsel %vm388, %v1912, 0
        %v1923 = vsel %vm388, %v1914, 0
        %v1926 = vsel %vm388, %v1916, 0
        %v1929 = vsel %vm388, %v1918, 0
        %v1932 = vsel %vm425, %v1910, 0
        %1934 = vmatprep.subr.bf16.mxu0 0
        %1935 = vmatpush1.bf16.msra.mxu0 %v1932
        %1936 = vmatprep.subr.bf16.mxu0 0
        %1937 = vmatpush1.bf16.msra.mxu0 0
        %1938 = vmatprep.subr.bf16.mxu0 0
        %1939 = vmatpush1.bf16.msra.mxu0 0
        %1940 = vmatprep.subr.bf16.mxu0 0
        %1941 = vmatpush1.bf16.msra.mxu0 0
        %1942 = vmatprep.subr.bf16.mxu0 0
        %1943 = vmatpush1.bf16.msra.mxu0 0
        %1944 = vmatprep.subr.bf16.mxu0 0
        %1945 = vmatpush1.bf16.msra.mxu0 0
        %1946 = vmatprep.subr.bf16.mxu0 0
        %1947 = vmatpush1.bf16.msra.mxu0 0
        %1948 = vmatprep.subr.bf16.mxu0 0
        %1949 = vmatpush1.bf16.msra.mxu0 0
        %1950 = vmatprep.subr.bf16.mxu0 0
        %1951 = vmatpush1.bf16.msra.mxu0 0
        %1952 = vmatprep.subr.bf16.mxu0 0
        %1953 = vmatpush1.bf16.msra.mxu0 0
        %1954 = vmatprep.subr.bf16.mxu0 0
        %1955 = vmatpush1.bf16.msra.mxu0 0
        %1956 = vmatprep.subr.bf16.mxu0 0
        %1957 = vmatpush1.bf16.msra.mxu0 0
        %1958 = vmatprep.subr.bf16.mxu0 0
        %1959 = vmatpush1.bf16.msra.mxu0 0
        %1960 = vmatprep.subr.bf16.mxu0 0
        %1961 = vmatpush1.bf16.msra.mxu0 0
        %1962 = vmatprep.subr.bf16.mxu0 0
        %1963 = vmatpush1.bf16.msra.mxu0 0
        %1964 = vmatprep.subr.bf16.mxu0 0
        %1965 = vmatpush1.bf16.msra.mxu0 0
        %1966 = vmatprep.mubr.bf16.mxu0 0
        %1967 = vmatmul.mubr.bf16.gmra.mrb[0].mxu0 %v736
        %v1968 = vpop.f32.mrb[0].mxu0
        %v1969 = vadd.f32 0.0, %v1968
        %v1970 = vpop.f32.mrb[0].mxu0
        %v1971 = vpop.f32.mrb[0].mxu0
        %v1972 = vadd.f32 0.0, %v1971
        %v1973 = vpop.f32.mrb[0].mxu0
        %1974 = vmatprep.mubr.bf16.mxu0 0
        %1975 = vmatmul.mubr.bf16.gmra.mrb[0].mxu0 %v739
        %v1976 = vpop.f32.mrb[0].mxu0
        %v1977 = vpop.f32.mrb[0].mxu0
        %v1978 = vpop.f32.mrb[0].mxu0
        %v1979 = vadd.f32 0.0, %v1978
        %v1980 = vpop.f32.mrb[0].mxu0
        %1981 = vmatprep.mubr.bf16.mxu0 0
        %1982 = vmatmul.mubr.bf16.gmra.mrb[0].mxu0 %v742
        %v1983 = vpop.f32.mrb[0].mxu0
        %v1984 = vadd.f32 0.0, %v1983
        %v1985 = vpop.f32.mrb[0].mxu0
        %v1986 = vpop.f32.mrb[0].mxu0
        %v1987 = vpop.f32.mrb[0].mxu0
        %1988 = vmatprep.mubr.bf16.mxu0 0
        %1989 = vmatmul.mubr.bf16.gmra.mrb[0].mxu0 %v745
        %v1990 = vpop.f32.mrb[0].mxu0
        %v1991 = vadd.f32 0.0, %v1990
        %v1992 = vpop.f32.mrb[0].mxu0
        %v1993 = vpop.f32.mrb[0].mxu0
        %v1994 = vadd.f32 0.0, %v1993
        %v1995 = vpop.f32.mrb[0].mxu0
        %1996 = vmatprep.mubr.bf16.mxu0 0
        %1997 = vmatmul.mubr.bf16.gmra.mrb[0].mxu0 %v748
        %v1998 = vpop.f32.mrb[0].mxu0
        %v1999 = vpop.f32.mrb[0].mxu0
        %v2000 = vpop.f32.mrb[0].mxu0
        %v2001 = vadd.f32 0.0, %v2000
        %v2002 = vpop.f32.mrb[0].mxu0
        %2003 = vmatprep.mubr.bf16.mxu0 0
        %2004 = vmatmul.mubr.bf16.gmra.mrb[0].mxu0 %v751
        %v2005 = vpop.f32.mrb[0].mxu0
        %v2006 = vadd.f32 0.0, %v2005
        %v2007 = vpop.f32.mrb[0].mxu0
        %v2008 = vpop.f32.mrb[0].mxu0
        %v2009 = vpop.f32.mrb[0].mxu0
        %2010 = vmatprep.mubr.bf16.mxu0 0
        %2011 = vmatmul.mubr.bf16.gmra.mrb[0].mxu0 %v754
        %v2012 = vpop.f32.mrb[0].mxu0
        %v2013 = vadd.f32 0.0, %v2012
        %v2014 = vpop.f32.mrb[0].mxu0
        %v2015 = vpop.f32.mrb[0].mxu0
        %v2016 = vadd.f32 0.0, %v2015
        %v2017 = vpop.f32.mrb[0].mxu0
        %2018 = vmatprep.mubr.bf16.mxu0 0
        %2019 = vmatmul.mubr.bf16.gmra.mrb[0].mxu0 %v757
        %v2020 = vpop.f32.mrb[0].mxu0
        %v2021 = vpop.f32.mrb[0].mxu0
        %v2022 = vpop.f32.mrb[0].mxu0
        %v2023 = vadd.f32 0.0, %v2022
        %v2024 = vpop.f32.mrb[0].mxu0
        %2025 = vmatprep.mubr.bf16.mxu0 0
        %2026 = vmatmul.mubr.bf16.gmra.mrb[0].mxu0 %v1920
        %v2027 = vpop.f32.mrb[0].mxu0
        %v2028 = vadd.f32 0.0, %v2027
        %v2029 = vpop.f32.mrb[0].mxu0
        %v2030 = vpop.f32.mrb[0].mxu0
        %v2031 = vpop.f32.mrb[0].mxu0
        %2032 = vmatprep.mubr.bf16.mxu0 0
        %2033 = vmatmul.mubr.bf16.gmra.mrb[0].mxu0 %v1923
        %v2034 = vpop.f32.mrb[0].mxu0
        %v2035 = vadd.f32 0.0, %v2034
        %v2036 = vpop.f32.mrb[0].mxu0
        %v2037 = vpop.f32.mrb[0].mxu0
        %v2038 = vadd.f32 0.0, %v2037
        %v2039 = vpop.f32.mrb[0].mxu0
        %2040 = vmatprep.mubr.bf16.mxu0 0
        %2041 = vmatmul.mubr.bf16.gmra.mrb[0].mxu0 %v1926
        %v2042 = vpop.f32.mrb[0].mxu0
        %v2043 = vpop.f32.mrb[0].mxu0
        %v2044 = vpop.f32.mrb[0].mxu0
        %v2045 = vadd.f32 0.0, %v2044
        %v2046 = vpop.f32.mrb[0].mxu0
        %2047 = vmatprep.mubr.bf16.mxu0 0
        %2048 = vmatmul.mubr.bf16.gmra.mrb[0].mxu0 %v1929
        %v2049 = vpop.f32.mrb[0].mxu0
        %v2050 = vadd.f32 0.0, %v2049
        %v2051 = vpop.f32.mrb[0].mxu0
        %v2052 = vpop.f32.mrb[0].mxu0
        %v2053 = vpop.f32.mrb[0].mxu0
        %2054 = vdwg.mxu0
        %v2055 = vadd.f32 %v1893, %v1969
        %v2056 = vadd.f32 %v1894, %v1972
        %v2057 = vadd.f32 %v1895, %v1979
        %v2058 = vadd.f32 %v1896, %v1984
        %v2059 = vadd.f32 %v1897, %v1991
        %v2060 = vadd.f32 %v1898, %v1994
        %v2061 = vadd.f32 %v1899, %v2001
        %v2062 = vadd.f32 %v1900, %v2006
        %v2063 = vadd.f32 %v1901, %v2013
        %v2064 = vadd.f32 %v1902, %v2016
        %v2065 = vadd.f32 %v1903, %v2023
        %v2066 = vadd.f32 %v1904, %v2028
        %v2067 = vadd.f32 %v1905, %v2035
        %v2068 = vadd.f32 %v1906, %v2038
        %v2069 = vadd.f32 %v1907, %v2045
        %v2070 = vadd.f32 %v1908, %v2050
        %v2071 = vld [vmem:[%s2] sm:$0x1]
        %v2073 = vlaneseq
        %v2074 = vshrl.u32 %v2073, 7
        %v2075 = vsub.s32 0, %v2074
        %v2076 = vrot.slane %v2071, %v2075
        %v2078 = vadd.f32 %v2055, %v2076
        %v2079 = vadd.f32 %v2056, %v2076
        %v2080 = vadd.f32 %v2057, %v2076
        %v2081 = vadd.f32 %v2058, %v2076
        %v2082 = vadd.f32 %v2059, %v2076
        %v2083 = vadd.f32 %v2060, %v2076
        %v2084 = vadd.f32 %v2061, %v2076
        %v2085 = vadd.f32 %v2062, %v2076
        %v2086 = vadd.f32 %v2063, %v2076
        %v2087 = vadd.f32 %v2064, %v2076
        %v2088 = vadd.f32 %v2065, %v2076
        %v2089 = vadd.f32 %v2066, %v2076
        %v2090 = vadd.f32 %v2067, %v2076
        %v2091 = vadd.f32 %v2068, %v2076
        %v2092 = vadd.f32 %v2069, %v2076
        %v2093 = vadd.f32 %v2070, %v2076
        %v2094 = vmax.f32 %v2078, 0.0
        %v2095 = vmax.f32 %v2079, 0.0
        %v2096 = vmax.f32 %v2080, 0.0
        %v2097 = vmax.f32 %v2081, 0.0
        %v2098 = vmax.f32 %v2082, 0.0
        %v2099 = vmax.f32 %v2083, 0.0
        %v2100 = vmax.f32 %v2084, 0.0
        %v2101 = vmax.f32 %v2085, 0.0
        %v2102 = vmax.f32 %v2086, 0.0
        %v2103 = vmax.f32 %v2087, 0.0
        %v2104 = vmax.f32 %v2088, 0.0
        %v2105 = vmax.f32 %v2089, 0.0
        %v2106 = vmax.f32 %v2090, 0.0
        %v2107 = vmax.f32 %v2091, 0.0
        %v2108 = vmax.f32 %v2092, 0.0
        %v2109 = vmax.f32 %v2093, 0.0
        %2110 = vst [vmem:[%s177] sm:$0xff] %v2094
        %2111 = vst [vmem:[%s177 + $0x8] sm:$0xff] %v2095
        %2112 = vst [vmem:[%s177 + $0x10] sm:$0xff] %v2096
        %2113 = vst [vmem:[%s177 + $0x18] sm:$0xff] %v2097
        %2114 = vst [vmem:[%s177 + $0x20] sm:$0xff] %v2098
        %2115 = vst [vmem:[%s177 + $0x28] sm:$0xff] %v2099
        %2116 = vst [vmem:[%s177 + $0x30] sm:$0xff] %v2100
        %2117 = vst [vmem:[%s177 + $0x38] sm:$0xff] %v2101
        %2118 = vst [vmem:[%s177 + $0x40] sm:$0xff] %v2102
        %2119 = vst [vmem:[%s177 + $0x48] sm:$0xff] %v2103
        %2120 = vst [vmem:[%s177 + $0x50] sm:$0xff] %v2104
        %2121 = vst [vmem:[%s177 + $0x58] sm:$0xff] %v2105
        %2122 = vst [vmem:[%s177 + $0x60] sm:$0xff] %v2106
        %2123 = vst [vmem:[%s177 + $0x68] sm:$0xff] %v2107
        %2124 = vst [vmem:[%s177 + $0x70] sm:$0xff] %v2108
        %2125 = vst [vmem:[%s177 + $0x78] sm:$0xff] %v2109
        %s2126 = sand.u32 %s107, 1
        %s2127 = scalar_lea.sflag [#allocation3], %s2126
        %s2128 = sand.u32 %s107, 1
        %s2129 = smul.addr %s2128, 128
        %s2130 = scalar_lea.vmem [#allocation2], %s2129
        // Predicated region
        $region33: #{tpu_custom_call.1} parent=31 // pred_check
          %p2131 = pneg %p117
        $region34: #{tpu_custom_call.1} parent=31 // pred_check_branch
          %2133 = sbr.rel (%p2131) target = $region36
        $region35: #{tpu_custom_call.1} parent=31 // pred_region
          %s2134 = smul.u32 8, %s22
          %s2136 = ssub.s32 2048, 2048
          %2137 = vsyncadd %s2127, %s2136
          %s2138 = smul.addr %s2134, 2
          %s2139 = smul.addr %s21, 32
          %s2140 = sadd.s32 %s2138, %s2139
          %s2141 = smul.addr %s2140, 128
          %s2142 = scalar_lea.hbm %s3, %s2141
          %s2143 = sshll.u32 %s2130, 4
          %s2144 = int_to_ptr.vmem [resolvable:$true] %s2143
          %2149 = dma.vmem_to_hbm [thread:$0]  %s2144, 2048, %s2142, %s2127, 128, 128, 8
        $region36: #{tpu_custom_call.1} parent=31 // pred_fallthru
          _
      $region32: #{tpu_custom_call.1} parent=5 // pred_fallthru
        _
      %p2150 = scmp.le.s32.totalorder 2, %s12
      // Predicated region
      $region37: #{tpu_custom_call.1} parent=5 // pred_check
        %p2151 = pneg %p2150
      $region38: #{tpu_custom_call.1} parent=5 // pred_check_branch
        %2153 = sbr.rel (%p2151) target = $region40
      $region39: #{tpu_custom_call.1} parent=5 // pred_region
        %s2154 = ssub.s32 %s12, 2
        // Predicated region
        $region41: #{tpu_custom_call.1} parent=39 // pred_check
          %p2155 = pneg %p123
        $region42: #{tpu_custom_call.1} parent=39 // pred_check_branch
          %2157 = sbr.rel (%p2155) target = $region44
        $region43: #{tpu_custom_call.1} parent=39 // pred_region
          %s2158 = sand.u32 %s108, 1
          %s2159 = scalar_lea.sflag [#allocation3], %s2158
          %s2160 = sand.u32 %s108, 1
          %s2161 = smul.addr %s2160, 128
          %s2162 = scalar_lea.vmem [#allocation2], %s2161
          %2163 = dma.done %s2159, 2048
        $region44: #{tpu_custom_call.1} parent=39 // pred_fallthru
          _
      $region40: #{tpu_custom_call.1} parent=5 // pred_fallthru
        _
    $region6: #{tpu_custom_call.1} parent=1 // loop_footer
      %s16 = sadd.s32 1, %s12
    $region7: #{tpu_custom_call.1} parent=1 // loop_footer_branch
      %11 = sbr.rel target = $region3
    $region8: #{tpu_custom_call.1} parent=1 // loop_exit
      _
    %2164 = vsyncpa [#allocation3], 1
    %s2165 = scalar_lea.sflag [#allocation3], 1
    %2166 = vsyncpa %s2165, 1

</llo_original>
